<compile_context>
chip_gen: v5e
topology: v5e:2x2
jax: 0.10.0
libtpu: 0.0.40
codegen_flags: <defaults>
</compile_context>

<pallas_src>
import functools
import math

import jax
import jax.numpy as jnp
from jax.experimental import pallas as pl
from jax.experimental.pallas import tpu as pltpu

_PAD = 128  # lane-aligned halo width inside the depthwise-conv VMEM scratch


# --------------------------------------------------------------------------
# In-kernel building blocks
# --------------------------------------------------------------------------
def _dw_same(x, w, b, pad_ref, K, H, W):
    """Depthwise KxK 'same' conv on a (C, H*W) tile.

    x:       (C, H*W) f32 value (channels on sublanes, spatial on lanes)
    w:       (C, K*K) f32 value, tap order kh*K + kw
    b:       (C, 1)   f32 value (per-channel bias; zeros if none)
    pad_ref: (C, H*W + 2*_PAD) VMEM scratch used as a zero halo.
    Returns  (C, H*W) f32.
    """
    C, HW = x.shape
    P = K // 2
    zero_halo = jnp.zeros((C, _PAD), jnp.float32)
    pad_ref[:, :_PAD] = zero_halo
    pad_ref[:, _PAD + HW:] = zero_halo
    pad_ref[:, _PAD:_PAD + HW] = x                       # aligned interior store

    col = jax.lax.broadcasted_iota(jnp.int32, (1, HW), 1) % W
    acc = jnp.zeros((C, HW), jnp.float32)
    for kh in range(K):
        for kw in range(K):
            dy, dx = kh - P, kw - P
            off = dy * W + dx
            sh = pad_ref[:, _PAD + off:_PAD + off + HW]  # shifted window load
            if dx != 0:  # mask row-boundary (column wrap) lanes
                valid = jnp.logical_and(col + dx >= 0, col + dx < W)
                sh = jnp.where(valid, sh, 0.0)
            tap = kh * K + kw
            acc = acc + sh * w[:, tap:tap + 1]
    return acc + b


# --------------------------------------------------------------------------
# Pallas kernels
# --------------------------------------------------------------------------
def _conv_branch_kernel(x_ref, w3d_ref, b3d_ref, w3p_ref, b3p_ref,
                        w5d_ref, b5d_ref, w5p_ref, b5p_ref,
                        o_ref, pad_ref, *, H, W):
    """Fused conv3x3 (dw+pw) -> conv5x5 (dw+pw); all intermediates stay in VMEM."""
    x = x_ref[0]                                                     # (C, HW)
    t = _dw_same(x, w3d_ref[...], b3d_ref[...], pad_ref, 3, H, W)
    t = jnp.dot(w3p_ref[...], t, preferred_element_type=jnp.float32) + b3p_ref[...]
    t = _dw_same(t, w5d_ref[...], b5d_ref[...], pad_ref, 5, H, W)
    t = jnp.dot(w5p_ref[...], t, preferred_element_type=jnp.float32) + b5p_ref[...]
    o_ref[0] = t


def _qkv_agg_kernel(x_ref, wq_ref, wad_ref, wap_ref, o_ref, pad_ref, *, H, W):
    """qkv 1x1 conv + multi-scale aggregation (dw5x5 + grouped 1x1), concatenated.

    o_ref rows [0, 3T) = qkv, rows [3T, 6T) = aggregated qkv.
    """
    x = x_ref[0]                                                     # (Cin, HW)
    qkv = jnp.dot(wq_ref[...], x, preferred_element_type=jnp.float32)
    t3 = qkv.shape[0]
    agg = _dw_same(qkv, wad_ref[...], jnp.zeros((t3, 1), jnp.float32),
                   pad_ref, 5, H, W)
    agg = jnp.dot(wap_ref[...], agg, preferred_element_type=jnp.float32)
    o_ref[0, 0:t3, :] = qkv
    o_ref[0, t3:2 * t3, :] = agg


def _linear_att_kernel(q_ref, k_ref, v_ref, s_ref, o_ref, *, eps):
    """ReLU linear attention core for one (batch, head) in (dim, HW) layout."""
    def feat(x):                                     # relu kernel + cube re-norm
        x = jnp.maximum(x, 0.0) + 1e-6
        x = x / s_ref[...]
        n1 = jnp.sqrt(jnp.sum(x * x, axis=1, keepdims=True))
        x3 = x * x * x
        n3 = jnp.sqrt(jnp.sum(x3 * x3, axis=1, keepdims=True))
        return (x3 / n3) * n1

    qf = feat(q_ref[0])                              # (dim, HW)
    kf = feat(k_ref[0])
    v = v_ref[0]
    # denominator: (sum_s k)^T q  per spatial position
    ksum = jnp.sum(kf, axis=1, keepdims=True)                        # (dim, 1)
    den = jnp.sum(qf * ksum, axis=0, keepdims=True)                  # (1, HW)
    # numerator: (v k^T) q   -- lane-dense output (dim, HW)
    kvh = jax.lax.dot_general(v, kf, (((1,), (1,)), ((), ())),
                              preferred_element_type=jnp.float32)    # (dim, dim)
    num = jnp.dot(kvh, qf, preferred_element_type=jnp.float32)       # (dim, HW)
    o_ref[0] = num / (den + eps)


def _tail_kernel(lin_ref, v1_ref, samp_ref, rc_ref, ca_ref,
                 wdwc_ref, bdwc_ref, wp_ref, bp_ref, o_ref, pad_ref, *, H, W):
    """Fused: dwc 5x5 depthwise + sum of attention terms + proj 1x1 (BN folded)
    + squeeze-excite-gated residual add."""
    t = lin_ref[0] + samp_ref[0]
    t = t + _dw_same(v1_ref[0], wdwc_ref[...], bdwc_ref[...], pad_ref, 5, H, W)
    y = jnp.dot(wp_ref[...], t, preferred_element_type=jnp.float32) + bp_ref[...]
    o_ref[0] = y + rc_ref[0] * ca_ref[0]


# --------------------------------------------------------------------------
# pallas_call wrappers
# --------------------------------------------------------------------------
def _const_specs(arrays):
    return [pl.BlockSpec(a.shape, lambda n, _d=a.ndim: (0,) * _d) for a in arrays]


def _conv_branch_call(x, ws, H, W):
    B, C, HW = x.shape
    kern = functools.partial(_conv_branch_kernel, H=H, W=W)
    bspec = pl.BlockSpec((1, C, HW), lambda n: (n, 0, 0))
    return pl.pallas_call(
        kern,
        out_shape=jax.ShapeDtypeStruct((B, C, HW), jnp.float32),
        grid=(B,),
        in_specs=[bspec] + _const_specs(ws),
        out_specs=bspec,
        scratch_shapes=[pltpu.VMEM((C, HW + 2 * _PAD), jnp.float32)],
        compiler_params=pltpu.CompilerParams(dimension_semantics=("parallel",)),
    )(x, *ws)


def _qkv_agg_call(x, w_qkv, w_aggdw, w_aggpw, H, W):
    B, C, HW = x.shape
    T3 = w_qkv.shape[0]
    kern = functools.partial(_qkv_agg_kernel, H=H, W=W)
    return pl.pallas_call(
        kern,
        out_shape=jax.ShapeDtypeStruct((B, 2 * T3, HW), jnp.float32),
        grid=(B,),
        in_specs=[pl.BlockSpec((1, C, HW), lambda n: (n, 0, 0))]
                + _const_specs([w_qkv, w_aggdw, w_aggpw]),
        out_specs=pl.BlockSpec((1, 2 * T3, HW), lambda n: (n, 0, 0)),
        scratch_shapes=[pltpu.VMEM((T3, HW + 2 * _PAD), jnp.float32)],
        compiler_params=pltpu.CompilerParams(dimension_semantics=("parallel",)),
    )(x, w_qkv, w_aggdw, w_aggpw)


def _linear_att_call(ms, s_vec, dim, eps):
    B, CM, HW = ms.shape
    nh = CM // (3 * dim)
    kern = functools.partial(_linear_att_kernel, eps=eps)

    def qkv_spec(off):
        return pl.BlockSpec((1, dim, HW), lambda b, h, _o=off: (b, 3 * h + _o, 0))

    return pl.pallas_call(
        kern,
        out_shape=jax.ShapeDtypeStruct((B, nh * dim, HW), jnp.float32),
        grid=(B, nh),
        in_specs=[qkv_spec(0), qkv_spec(1), qkv_spec(2),
                  pl.BlockSpec((dim, 1), lambda b, h: (0, 0))],
        out_specs=pl.BlockSpec((1, dim, HW), lambda b, h: (b, h, 0)),
        compiler_params=pltpu.CompilerParams(
            dimension_semantics=("parallel", "parallel")),
    )(ms, ms, ms, s_vec)


def _tail_call(lin, v1, samp, rc, ca, w_dwc, b_dwc, w_proj, b_proj, H, W):
    B, C2, HW = lin.shape
    C = rc.shape[1]
    kern = functools.partial(_tail_kernel, H=H, W=W)

    def bspec(c, last):
        return pl.BlockSpec((1, c, last), lambda n: (n, 0, 0))

    return pl.pallas_call(
        kern,
        out_shape=jax.ShapeDtypeStruct((B, C, HW), jnp.float32),
        grid=(B,),
        in_specs=[bspec(C2, HW), bspec(C2, HW), bspec(C2, HW),
                  bspec(C, HW), bspec(C, 1)]
                + _const_specs([w_dwc, b_dwc, w_proj, b_proj]),
        out_specs=bspec(C, HW),
        scratch_shapes=[pltpu.VMEM((C2, HW + 2 * _PAD), jnp.float32)],
        compiler_params=pltpu.CompilerParams(dimension_semantics=("parallel",)),
    )(lin, v1, samp, rc, ca, w_dwc, b_dwc, w_proj, b_proj)


# --------------------------------------------------------------------------
# Plain-JAX glue shared by the Pallas path and the reference
# --------------------------------------------------------------------------
def _fold_bn(gamma, beta, mean, var, eps=1e-5):
    s = gamma / jnp.sqrt(var + eps)
    return s, beta - mean * s


def _block_diag(blocks):
    g, m, n = blocks.shape
    out = jnp.zeros((g * m, g * n), blocks.dtype)
    for i in range(g):
        out = out.at[i * m:(i + 1) * m, i * n:(i + 1) * n].set(blocks[i])
    return out


def _channel_attention(rc_flat, p):
    """Squeeze-excite gate: global avg pool -> 1x1 -> ReLU -> 1x1 -> sigmoid."""
    pooled = jnp.mean(rc_flat, axis=-1)                               # (B, C)
    h = jnp.maximum(pooled @ p["w_ca1"].T + p["b_ca1"], 0.0)
    g = jax.nn.sigmoid(h @ p["w_ca2"].T + p["b_ca2"])                 # (B, C)
    return g[..., None]                                               # (B, C, 1)


def _sampled_attention(q, k, v, scale_add):
    """Data-dependent sampled quadratic attention (kept in plain JAX).

    TODO(synk): top-k selection / gather / scatter are data-dependent and left
    in XLA; the tensors involved are tiny (topk = 2*sqrt(HW) tokens).
    Returns the scattered result already multiplied by scale_add.
    """
    B, nh, HW, dim = q.shape
    topk = int(2 * math.sqrt(HW))
    num_keep = int(topk * 50 / 100)
    score = q.mean(axis=-1) + q.std(axis=-1, ddof=1)                  # (B,nh,HW)
    _, idx = jax.lax.top_k(score, topk)                               # (B,nh,topk)
    take = lambda t: jnp.take_along_axis(t, idx[..., None], axis=2)
    q_s, k_s, v_s = take(q), take(k), take(v)                         # (B,nh,topk,d)
    att = jnp.einsum("bhtd,bhsd->bhts", q_s, k_s) / jnp.sqrt(jnp.float32(dim))
    att = jax.nn.softmax(att, axis=-1)
    thr = jnp.sort(att, axis=-1)[..., topk - num_keep]                # (B,nh,topk)
    att = jnp.where(att >= thr[..., None], att, 0.0)
    s_att = jnp.einsum("bhts,bhsd->bhtd", att, v_s) * scale_add
    onehot = (idx[..., None] == jnp.arange(HW)[None, None, None, :]).astype(q.dtype)
    return jnp.einsum("bhts,bhtd->bhsd", onehot, s_att)               # (B,nh,HW,d)


def _dw_w(w):
    """Torch depthwise weight (C,K,K) -> kernel layout (C, K*K)."""
    C, K, _ = w.shape
    return w.reshape(C, K * K).astype(jnp.float32)


def _colvec(b):
    return b.astype(jnp.float32)[:, None]


# --------------------------------------------------------------------------
# LiteMLA forward (Pallas path)
# --------------------------------------------------------------------------
def lite_mla_forward(x_nchw, p, dim=8, eps=1e-15):
    B, C, H, W = x_nchw.shape
    HW = H * W
    x = x_nchw.reshape(B, C, HW).astype(jnp.float32)      # NCHW -> (B, C, H*W)

    # ---- conv3x3 -> conv5x5 branch (one fused pallas_call) ----
    rc = _conv_branch_call(
        x,
        (_dw_w(p["w_dw3"]), _colvec(p["b_dw3"]), p["w_pw3"], _colvec(p["b_pw3"]),
         _dw_w(p["w_dw5"]), _colvec(p["b_dw5"]), p["w_pw5"], _colvec(p["b_pw5"])),
        H, W)
    ca = _channel_attention(rc, p)                                    # (B, C, 1)

    # ---- qkv 1x1 + multi-scale aggregation (one fused pallas_call) ----
    ms = _qkv_agg_call(x, p["w_qkv"], _dw_w(p["w_aggdw"]),
                       _block_diag(p["w_aggpw_groups"]), H, W)        # (B,6T,HW)

    # ---- ReLU linear attention core (Pallas, grid over batch x heads) ----
    s_vec = jax.nn.softplus(p["scale"]).reshape(dim, 1).astype(jnp.float32)
    lin = _linear_att_call(ms, s_vec, dim, eps)                       # (B,2C,HW)

    # ---- sampled quadratic attention + layout glue (plain JAX) ----
    nh = ms.shape[1] // (3 * dim)
    qkvT = jnp.swapaxes(ms.reshape(B, nh, 3 * dim, HW), -1, -2)       # (B,nh,HW,3d)
    q, k, v = qkvT[..., :dim], qkvT[..., dim:2 * dim], qkvT[..., 2 * dim:]
    samp_f = _sampled_attention(q, k, v, p["scale_add"]).reshape(B, nh * dim, HW)
    v1_f = v.reshape(B, nh * dim, HW)      # same "raw" reshape as the PyTorch code

    # ---- dwc + sum + proj(+BN folded) + SE-gated residual (one pallas_call) ----
    bn_s, bn_b = _fold_bn(p["bn_gamma"], p["bn_beta"], p["bn_mean"], p["bn_var"])
    w_proj_f = p["w_proj"] * bn_s[:, None]
    out = _tail_call(lin, v1_f, samp_f, rc, ca,
                     _dw_w(p["w_dwc"]), _colvec(p["b_dwc"]),
                     w_proj_f, _colvec(bn_b), H, W)
    return out.reshape(B, C, H, W)


# --------------------------------------------------------------------------
# Plain-JAX reference (lax convs / einsums) for a correctness cross-check
# --------------------------------------------------------------------------
def _reference_forward(x, p, dim=8, eps=1e-15):
    B, C, H, W = x.shape
    HW = H * W

    def dw_ref(t, w, b, K):
        Cc = t.shape[1]
        w_hwio = jnp.transpose(w, (1, 2, 0))[:, :, None, :]           # (K,K,1,C)
        y = jax.lax.conv_general_dilated(
            t, w_hwio, (1, 1), [(K // 2, K // 2)] * 2,
            dimension_numbers=("NCHW", "HWIO", "NCHW"),
            feature_group_count=Cc)
        return y + b[None, :, None, None]

    def pw_ref(t, w, b=None):
        y = jnp.einsum("oi,bihw->bohw", w, t)
        return y if b is None else y + b[None, :, None, None]

    t = pw_ref(dw_ref(x, p["w_dw3"], p["b_dw3"], 3), p["w_pw3"], p["b_pw3"])
    rc = pw_ref(dw_ref(t, p["w_dw5"], p["b_dw5"], 5), p["w_pw5"], p["b_pw5"])
    ca = _channel_attention(rc.reshape(B, C, HW), p)
    rc = rc * ca[..., None]

    qkv = pw_ref(x, p["w_qkv"])
    agg = dw_ref(qkv, p["w_aggdw"], jnp.zeros((qkv.shape[1],), jnp.float32), 5)
    agg = pw_ref(agg, _block_diag(p["w_aggpw_groups"]))
    ms = jnp.concatenate([qkv, agg], axis=1)

    qkv4 = jnp.swapaxes(ms.reshape(B, -1, 3 * dim, HW), -1, -2)
    q, k, v = qkv4[..., :dim], qkv4[..., dim:2 * dim], qkv4[..., 2 * dim:]
    nh = q.shape[1]

    samp = _sampled_attention(q, k, v, p["scale_add"])
    sampled_result = samp.reshape(B, nh * dim, H, W)
    v1_reshaped = v.reshape(B, nh * dim, H, W)
    add_fm = dw_ref(v1_reshaped, p["w_dwc"], p["b_dwc"], 5)

    scale = jax.nn.softplus(p["scale"])
    qf = (jnp.maximum(q, 0.0) + 1e-6) / scale
    kf = (jnp.maximum(k, 0.0) + 1e-6) / scale
    qn = jnp.linalg.norm(qf, axis=-2, keepdims=True)
    kn = jnp.linalg.norm(kf, axis=-2, keepdims=True)
    qf, kf = qf ** 3, kf ** 3
    qf = qf / jnp.linalg.norm(qf, axis=-2, keepdims=True) * qn
    kf = kf / jnp.linalg.norm(kf, axis=-2, keepdims=True) * kn
    v_pad = jnp.concatenate([v, jnp.ones_like(v[..., :1])], axis=-1)
    kv = jnp.einsum("bhsd,bhse->bhde", kf, v_pad)
    out = jnp.einsum("bhsd,bhde->bhse", qf, kv)
    out = out[..., :-1] / (out[..., -1:] + eps)
    out = jnp.swapaxes(out, -1, -2).reshape(B, nh * dim, H, W)
    out = out + add_fm + sampled_result

    s, b = _fold_bn(p["bn_gamma"], p["bn_beta"], p["bn_mean"], p["bn_var"])
    y = pw_ref(out, p["w_proj"]) * s[None, :, None, None] + b[None, :, None, None]
    return y + rc


# --------------------------------------------------------------------------
# Parameters (LiteMLA(in=out=16, dim=8, heads=2, scales=(5,)))
# --------------------------------------------------------------------------
def make_params(key, C, dim=8):
    heads = C // dim
    T = heads * dim
    kit = iter(jax.random.split(key, 24))

    def rnd(shape, s=0.2):
        return (s * jax.random.normal(next(kit), shape)).astype(jnp.float32)

    cmid = max(C // 16, 1)
    p = {
        "w_dw3": rnd((C, 3, 3)), "b_dw3": rnd((C,)),
        "w_pw3": rnd((C, C)), "b_pw3": rnd((C,)),
        "w_dw5": rnd((C, 5, 5)), "b_dw5": rnd((C,)),
        "w_pw5": rnd((C, C)), "b_pw5": rnd((C,)),
        "w_ca1": rnd((cmid, C)), "b_ca1": rnd((cmid,)),
        "w_ca2": rnd((C, cmid)), "b_ca2": rnd((C,)),
        "w_qkv": rnd((3 * T, C)),
        "w_aggdw": rnd((3 * T, 5, 5)),
        "w_aggpw_groups": rnd((3 * heads, dim, dim)),
        "w_dwc": rnd((2 * C, 5, 5)), "b_dwc": rnd((2 * C,)),
        "scale": rnd((1, 1, 1, dim), 0.1),
        "scale_add": jnp.float32(1.0),
        "w_proj": rnd((C, 2 * T)),
        "bn_gamma": 1.0 + rnd((C,), 0.05),
        "bn_beta": rnd((C,), 0.05),
        "bn_mean": rnd((C,), 0.05),
        "bn_var": 1.0 + jnp.abs(rnd((C,), 0.05)),
    }
    return p


if __name__ == "__main__":
    key = jax.random.PRNGKey(0)
    kx, kp = jax.random.split(key)

    # Smallest shapes consistent with the module: dim=8 -> heads=2 needs C>=16,
    # and the squeeze-excite uses C//16 channels -> C=16, H=W=16, batch=2.
    B, C, H, W = 2, 16, 16, 16
    x = jax.random.normal(kx, (B, C, H, W), dtype=jnp.float32)
    params = make_params(kp, C)

    out = jax.block_until_ready(lite_mla_forward(x, params))
    ref = jax.block_until_ready(_reference_forward(x, params))

    assert out.shape == (B, C, H, W)
    err = float(jnp.max(jnp.abs(out - ref)))
    assert err < 2e-3, f"max abs err {err}"
    print("KERNEL_OK")
</pallas_src>

<mosaic_0001>
module attributes {stable_mosaic.version = 11 : i64} {
  func.func @_conv_branch_kernel(%arg0: i32, %arg1: memref<1x16x256xf32, #tpu.memory_space<vmem>>, %arg2: memref<16x9xf32, #tpu.memory_space<vmem>>, %arg3: memref<16x1xf32, #tpu.memory_space<vmem>>, %arg4: memref<16x16xf32, #tpu.memory_space<vmem>>, %arg5: memref<16x1xf32, #tpu.memory_space<vmem>>, %arg6: memref<16x25xf32, #tpu.memory_space<vmem>>, %arg7: memref<16x1xf32, #tpu.memory_space<vmem>>, %arg8: memref<16x16xf32, #tpu.memory_space<vmem>>, %arg9: memref<16x1xf32, #tpu.memory_space<vmem>>, %arg10: memref<1x16x256xf32, #tpu.memory_space<vmem>>, %arg11: memref<16x512xf32, #tpu.memory_space<vmem>>) attributes {dimension_semantics = [#tpu.dimension_semantics<parallel>], iteration_bounds = array<i64: 2>, scalar_prefetch = 0 : i64, scratch_operands = 1 : i64, tpu.core_type = #tpu.core_type<tc>, window_params = [{transform_indices = @transform_0, window_bounds = array<i64: 1, 16, 256>}, {pipeline_mode = #tpu.pipeline_mode<synchronous>, transform_indices = @transform_1, window_bounds = array<i64: 16, 9>}, {pipeline_mode = #tpu.pipeline_mode<synchronous>, transform_indices = @transform_2, window_bounds = array<i64: 16, 1>}, {pipeline_mode = #tpu.pipeline_mode<synchronous>, transform_indices = @transform_3, window_bounds = array<i64: 16, 16>}, {pipeline_mode = #tpu.pipeline_mode<synchronous>, transform_indices = @transform_4, window_bounds = array<i64: 16, 1>}, {pipeline_mode = #tpu.pipeline_mode<synchronous>, transform_indices = @transform_5, window_bounds = array<i64: 16, 25>}, {pipeline_mode = #tpu.pipeline_mode<synchronous>, transform_indices = @transform_6, window_bounds = array<i64: 16, 1>}, {pipeline_mode = #tpu.pipeline_mode<synchronous>, transform_indices = @transform_7, window_bounds = array<i64: 16, 16>}, {pipeline_mode = #tpu.pipeline_mode<synchronous>, transform_indices = @transform_8, window_bounds = array<i64: 16, 1>}, {transform_indices = @transform_9, window_bounds = array<i64: 1, 16, 256>}]} {
    %c0 = arith.constant 0 : index
    %c0_0 = arith.constant 0 : index
    %c0_1 = arith.constant 0 : index
    %0 = vector.load %arg1[%c0, %c0_0, %c0_1] : memref<1x16x256xf32, #tpu.memory_space<vmem>>, vector<1x16x256xf32>
    %1 = vector.shape_cast %0 : vector<1x16x256xf32> to vector<16x256xf32>
    %c0_2 = arith.constant 0 : index
    %c0_3 = arith.constant 0 : index
    %2 = vector.load %arg2[%c0_2, %c0_3] : memref<16x9xf32, #tpu.memory_space<vmem>>, vector<16x9xf32>
    %c0_4 = arith.constant 0 : index
    %c0_5 = arith.constant 0 : index
    %3 = vector.load %arg3[%c0_4, %c0_5] : memref<16x1xf32, #tpu.memory_space<vmem>>, vector<16x1xf32>
    %cst = arith.constant 0.000000e+00 : f32
    %4 = vector.broadcast %cst : f32 to vector<16x128xf32>
    %c0_6 = arith.constant 0 : index
    %c0_7 = arith.constant 0 : index
    %5 = vector.load %arg11[%c0_6, %c0_7] : memref<16x512xf32, #tpu.memory_space<vmem>>, vector<16x128xf32>
    tpu.vector_store %arg11[%c0_6, %c0_7], %4 {strides = array<i32>} : memref<16x512xf32, #tpu.memory_space<vmem>>, vector<16x128xf32>,
    %c0_8 = arith.constant 0 : index
    %c384 = arith.constant 384 : index
    %6 = vector.load %arg11[%c0_8, %c384] : memref<16x512xf32, #tpu.memory_space<vmem>>, vector<16x128xf32>
    tpu.vector_store %arg11[%c0_8, %c384], %4 {strides = array<i32>} : memref<16x512xf32, #tpu.memory_space<vmem>>, vector<16x128xf32>,
    %c0_9 = arith.constant 0 : index
    %c128 = arith.constant 128 : index
    %7 = vector.load %arg11[%c0_9, %c128] : memref<16x512xf32, #tpu.memory_space<vmem>>, vector<16x256xf32>
    tpu.vector_store %arg11[%c0_9, %c128], %1 {strides = array<i32>} : memref<16x512xf32, #tpu.memory_space<vmem>>, vector<16x256xf32>,
    %8 = tpu.iota {dimensions = array<i32: 1>} : vector<1x256xi32>
    %c16_i32 = arith.constant 16 : i32
    %c0_i32 = arith.constant 0 : i32
    %9 = arith.cmpi eq, %c16_i32, %c0_i32 : i32
    %c1_i32 = arith.constant 1 : i32
    %10 = arith.select %9, %c1_i32, %c16_i32 : i32
    %11 = vector.broadcast %10 : i32 to vector<1x256xi32>
    %12 = arith.remsi %8, %11 : vector<1x256xi32>
    %c0_i32_10 = arith.constant 0 : i32
    %13 = vector.broadcast %c0_i32_10 : i32 to vector<1x256xi32>
    %14 = arith.cmpi ne, %12, %13 : vector<1x256xi32>
    %c0_i32_11 = arith.constant 0 : i32
    %15 = vector.broadcast %c0_i32_11 : i32 to vector<1x256xi32>
    %16 = arith.cmpi slt, %12, %15 : vector<1x256xi32>
    %c0_i32_12 = arith.constant 0 : i32
    %17 = arith.cmpi slt, %10, %c0_i32_12 : i32
    %18 = vector.broadcast %17 : i1 to vector<1x256xi1>
    %19 = vector.broadcast %18 : vector<1x256xi1> to vector<1x256xi1>
    %20 = arith.xori %16, %19 : vector<1x256xi1>
    %21 = arith.andi %20, %14 : vector<1x256xi1>
    %22 = vector.broadcast %10 : i32 to vector<1x256xi32>
    %23 = arith.addi %12, %22 : vector<1x256xi32>
    %24 = arith.select %21, %23, %12 : vector<1x256xi1>, vector<1x256xi32>
    %cst_13 = arith.constant 0.000000e+00 : f32
    %25 = vector.broadcast %cst_13 : f32 to vector<16x256xf32>
    %c0_14 = arith.constant 0 : index
    %c111 = arith.constant 111 : index
    %26 = vector.load %arg11[%c0_14, %c111] : memref<16x512xf32, #tpu.memory_space<vmem>>, vector<16x256xf32>
    %c-1_i32 = arith.constant -1 : i32
    %27 = vector.broadcast %c-1_i32 : i32 to vector<1x256xi32>
    %28 = arith.addi %24, %27 : vector<1x256xi32>
    %c0_i32_15 = arith.constant 0 : i32
    %29 = vector.broadcast %c0_i32_15 : i32 to vector<1x256xi32>
    %30 = arith.cmpi sge, %28, %29 : vector<1x256xi32>
    %c-1_i32_16 = arith.constant -1 : i32
    %31 = vector.broadcast %c-1_i32_16 : i32 to vector<1x256xi32>
    %32 = arith.addi %24, %31 : vector<1x256xi32>
    %c16_i32_17 = arith.constant 16 : i32
    %33 = vector.broadcast %c16_i32_17 : i32 to vector<1x256xi32>
    %34 = arith.cmpi slt, %32, %33 : vector<1x256xi32>
    %35 = arith.andi %30, %34 : vector<1x256xi1>
    %cst_18 = arith.constant 0.000000e+00 : f32
    %36 = vector.shape_cast %35 : vector<1x256xi1> to vector<1x256xi1>
    %37 = vector.broadcast %36 : vector<1x256xi1> to vector<16x256xi1>
    %38 = vector.broadcast %cst_18 : f32 to vector<16x256xf32>
    %39 = arith.select %37, %26, %38 : vector<16x256xi1>, vector<16x256xf32>
    %40 = vector.extract_strided_slice %2 {offsets = [0, 0], sizes = [16, 1], strides = [1, 1]} : vector<16x9xf32> to vector<16x1xf32>
    %41 = vector.broadcast %40 : vector<16x1xf32> to vector<16x256xf32>
    %42 = arith.mulf %39, %41 : vector<16x256xf32>
    %43 = arith.addf %25, %42 : vector<16x256xf32>
    %c0_19 = arith.constant 0 : index
    %c112 = arith.constant 112 : index
    %44 = vector.load %arg11[%c0_19, %c112] : memref<16x512xf32, #tpu.memory_space<vmem>>, vector<16x256xf32>
    %45 = vector.extract_strided_slice %2 {offsets = [0, 1], sizes = [16, 1], strides = [1, 1]} : vector<16x9xf32> to vector<16x1xf32>
    %46 = vector.broadcast %45 : vector<16x1xf32> to vector<16x256xf32>
    %47 = arith.mulf %44, %46 : vector<16x256xf32>
    %48 = arith.addf %43, %47 : vector<16x256xf32>
    %c0_20 = arith.constant 0 : index
    %c113 = arith.constant 113 : index
    %49 = vector.load %arg11[%c0_20, %c113] : memref<16x512xf32, #tpu.memory_space<vmem>>, vector<16x256xf32>
    %c1_i32_21 = arith.constant 1 : i32
    %50 = vector.broadcast %c1_i32_21 : i32 to vector<1x256xi32>
    %51 = arith.addi %24, %50 : vector<1x256xi32>
    %c0_i32_22 = arith.constant 0 : i32
    %52 = vector.broadcast %c0_i32_22 : i32 to vector<1x256xi32>
    %53 = arith.cmpi sge, %51, %52 : vector<1x256xi32>
    %c1_i32_23 = arith.constant 1 : i32
    %54 = vector.broadcast %c1_i32_23 : i32 to vector<1x256xi32>
    %55 = arith.addi %24, %54 : vector<1x256xi32>
    %c16_i32_24 = arith.constant 16 : i32
    %56 = vector.broadcast %c16_i32_24 : i32 to vector<1x256xi32>
    %57 = arith.cmpi slt, %55, %56 : vector<1x256xi32>
    %58 = arith.andi %53, %57 : vector<1x256xi1>
    %cst_25 = arith.constant 0.000000e+00 : f32
    %59 = vector.shape_cast %58 : vector<1x256xi1> to vector<1x256xi1>
    %60 = vector.broadcast %59 : vector<1x256xi1> to vector<16x256xi1>
    %61 = vector.broadcast %cst_25 : f32 to vector<16x256xf32>
    %62 = arith.select %60, %49, %61 : vector<16x256xi1>, vector<16x256xf32>
    %63 = vector.extract_strided_slice %2 {offsets = [0, 2], sizes = [16, 1], strides = [1, 1]} : vector<16x9xf32> to vector<16x1xf32>
    %64 = vector.broadcast %63 : vector<16x1xf32> to vector<16x256xf32>
    %65 = arith.mulf %62, %64 : vector<16x256xf32>
    %66 = arith.addf %48, %65 : vector<16x256xf32>
    %c0_26 = arith.constant 0 : index
    %c127 = arith.constant 127 : index
    %67 = vector.load %arg11[%c0_26, %c127] : memref<16x512xf32, #tpu.memory_space<vmem>>, vector<16x256xf32>
    %c-1_i32_27 = arith.constant -1 : i32
    %68 = vector.broadcast %c-1_i32_27 : i32 to vector<1x256xi32>
    %69 = arith.addi %24, %68 : vector<1x256xi32>
    %c0_i32_28 = arith.constant 0 : i32
    %70 = vector.broadcast %c0_i32_28 : i32 to vector<1x256xi32>
    %71 = arith.cmpi sge, %69, %70 : vector<1x256xi32>
    %c-1_i32_29 = arith.constant -1 : i32
    %72 = vector.broadcast %c-1_i32_29 : i32 to vector<1x256xi32>
    %73 = arith.addi %24, %72 : vector<1x256xi32>
    %c16_i32_30 = arith.constant 16 : i32
    %74 = vector.broadcast %c16_i32_30 : i32 to vector<1x256xi32>
    %75 = arith.cmpi slt, %73, %74 : vector<1x256xi32>
    %76 = arith.andi %71, %75 : vector<1x256xi1>
    %cst_31 = arith.constant 0.000000e+00 : f32
    %77 = vector.shape_cast %76 : vector<1x256xi1> to vector<1x256xi1>
    %78 = vector.broadcast %77 : vector<1x256xi1> to vector<16x256xi1>
    %79 = vector.broadcast %cst_31 : f32 to vector<16x256xf32>
    %80 = arith.select %78, %67, %79 : vector<16x256xi1>, vector<16x256xf32>
    %81 = vector.extract_strided_slice %2 {offsets = [0, 3], sizes = [16, 1], strides = [1, 1]} : vector<16x9xf32> to vector<16x1xf32>
    %82 = vector.broadcast %81 : vector<16x1xf32> to vector<16x256xf32>
    %83 = arith.mulf %80, %82 : vector<16x256xf32>
    %84 = arith.addf %66, %83 : vector<16x256xf32>
    %c0_32 = arith.constant 0 : index
    %c128_33 = arith.constant 128 : index
    %85 = vector.load %arg11[%c0_32, %c128_33] : memref<16x512xf32, #tpu.memory_space<vmem>>, vector<16x256xf32>
    %86 = vector.extract_strided_slice %2 {offsets = [0, 4], sizes = [16, 1], strides = [1, 1]} : vector<16x9xf32> to vector<16x1xf32>
    %87 = vector.broadcast %86 : vector<16x1xf32> to vector<16x256xf32>
    %88 = arith.mulf %85, %87 : vector<16x256xf32>
    %89 = arith.addf %84, %88 : vector<16x256xf32>
    %c0_34 = arith.constant 0 : index
    %c129 = arith.constant 129 : index
    %90 = vector.load %arg11[%c0_34, %c129] : memref<16x512xf32, #tpu.memory_space<vmem>>, vector<16x256xf32>
    %c1_i32_35 = arith.constant 1 : i32
    %91 = vector.broadcast %c1_i32_35 : i32 to vector<1x256xi32>
    %92 = arith.addi %24, %91 : vector<1x256xi32>
    %c0_i32_36 = arith.constant 0 : i32
    %93 = vector.broadcast %c0_i32_36 : i32 to vector<1x256xi32>
    %94 = arith.cmpi sge, %92, %93 : vector<1x256xi32>
    %c1_i32_37 = arith.constant 1 : i32
    %95 = vector.broadcast %c1_i32_37 : i32 to vector<1x256xi32>
    %96 = arith.addi %24, %95 : vector<1x256xi32>
    %c16_i32_38 = arith.constant 16 : i32
    %97 = vector.broadcast %c16_i32_38 : i32 to vector<1x256xi32>
    %98 = arith.cmpi slt, %96, %97 : vector<1x256xi32>
    %99 = arith.andi %94, %98 : vector<1x256xi1>
    %cst_39 = arith.constant 0.000000e+00 : f32
    %100 = vector.shape_cast %99 : vector<1x256xi1> to vector<1x256xi1>
    %101 = vector.broadcast %100 : vector<1x256xi1> to vector<16x256xi1>
    %102 = vector.broadcast %cst_39 : f32 to vector<16x256xf32>
    %103 = arith.select %101, %90, %102 : vector<16x256xi1>, vector<16x256xf32>
    %104 = vector.extract_strided_slice %2 {offsets = [0, 5], sizes = [16, 1], strides = [1, 1]} : vector<16x9xf32> to vector<16x1xf32>
    %105 = vector.broadcast %104 : vector<16x1xf32> to vector<16x256xf32>
    %106 = arith.mulf %103, %105 : vector<16x256xf32>
    %107 = arith.addf %89, %106 : vector<16x256xf32>
    %c0_40 = arith.constant 0 : index
    %c143 = arith.constant 143 : index
    %108 = vector.load %arg11[%c0_40, %c143] : memref<16x512xf32, #tpu.memory_space<vmem>>, vector<16x256xf32>
    %c-1_i32_41 = arith.constant -1 : i32
    %109 = vector.broadcast %c-1_i32_41 : i32 to vector<1x256xi32>
    %110 = arith.addi %24, %109 : vector<1x256xi32>
    %c0_i32_42 = arith.constant 0 : i32
    %111 = vector.broadcast %c0_i32_42 : i32 to vector<1x256xi32>
    %112 = arith.cmpi sge, %110, %111 : vector<1x256xi32>
    %c-1_i32_43 = arith.constant -1 : i32
    %113 = vector.broadcast %c-1_i32_43 : i32 to vector<1x256xi32>
    %114 = arith.addi %24, %113 : vector<1x256xi32>
    %c16_i32_44 = arith.constant 16 : i32
    %115 = vector.broadcast %c16_i32_44 : i32 to vector<1x256xi32>
    %116 = arith.cmpi slt, %114, %115 : vector<1x256xi32>
    %117 = arith.andi %112, %116 : vector<1x256xi1>
    %cst_45 = arith.constant 0.000000e+00 : f32
    %118 = vector.shape_cast %117 : vector<1x256xi1> to vector<1x256xi1>
    %119 = vector.broadcast %118 : vector<1x256xi1> to vector<16x256xi1>
    %120 = vector.broadcast %cst_45 : f32 to vector<16x256xf32>
    %121 = arith.select %119, %108, %120 : vector<16x256xi1>, vector<16x256xf32>
    %122 = vector.extract_strided_slice %2 {offsets = [0, 6], sizes = [16, 1], strides = [1, 1]} : vector<16x9xf32> to vector<16x1xf32>
    %123 = vector.broadcast %122 : vector<16x1xf32> to vector<16x256xf32>
    %124 = arith.mulf %121, %123 : vector<16x256xf32>
    %125 = arith.addf %107, %124 : vector<16x256xf32>
    %c0_46 = arith.constant 0 : index
    %c144 = arith.constant 144 : index
    %126 = vector.load %arg11[%c0_46, %c144] : memref<16x512xf32, #tpu.memory_space<vmem>>, vector<16x256xf32>
    %127 = vector.extract_strided_slice %2 {offsets = [0, 7], sizes = [16, 1], strides = [1, 1]} : vector<16x9xf32> to vector<16x1xf32>
    %128 = vector.broadcast %127 : vector<16x1xf32> to vector<16x256xf32>
    %129 = arith.mulf %126, %128 : vector<16x256xf32>
    %130 = arith.addf %125, %129 : vector<16x256xf32>
    %c0_47 = arith.constant 0 : index
    %c145 = arith.constant 145 : index
    %131 = vector.load %arg11[%c0_47, %c145] : memref<16x512xf32, #tpu.memory_space<vmem>>, vector<16x256xf32>
    %c1_i32_48 = arith.constant 1 : i32
    %132 = vector.broadcast %c1_i32_48 : i32 to vector<1x256xi32>
    %133 = arith.addi %24, %132 : vector<1x256xi32>
    %c0_i32_49 = arith.constant 0 : i32
    %134 = vector.broadcast %c0_i32_49 : i32 to vector<1x256xi32>
    %135 = arith.cmpi sge, %133, %134 : vector<1x256xi32>
    %c1_i32_50 = arith.constant 1 : i32
    %136 = vector.broadcast %c1_i32_50 : i32 to vector<1x256xi32>
    %137 = arith.addi %24, %136 : vector<1x256xi32>
    %c16_i32_51 = arith.constant 16 : i32
    %138 = vector.broadcast %c16_i32_51 : i32 to vector<1x256xi32>
    %139 = arith.cmpi slt, %137, %138 : vector<1x256xi32>
    %140 = arith.andi %135, %139 : vector<1x256xi1>
    %cst_52 = arith.constant 0.000000e+00 : f32
    %141 = vector.shape_cast %140 : vector<1x256xi1> to vector<1x256xi1>
    %142 = vector.broadcast %141 : vector<1x256xi1> to vector<16x256xi1>
    %143 = vector.broadcast %cst_52 : f32 to vector<16x256xf32>
    %144 = arith.select %142, %131, %143 : vector<16x256xi1>, vector<16x256xf32>
    %145 = vector.extract_strided_slice %2 {offsets = [0, 8], sizes = [16, 1], strides = [1, 1]} : vector<16x9xf32> to vector<16x1xf32>
    %146 = vector.broadcast %145 : vector<16x1xf32> to vector<16x256xf32>
    %147 = arith.mulf %144, %146 : vector<16x256xf32>
    %148 = arith.addf %130, %147 : vector<16x256xf32>
    %149 = vector.broadcast %3 : vector<16x1xf32> to vector<16x256xf32>
    %150 = arith.addf %148, %149 : vector<16x256xf32>
    %c0_53 = arith.constant 0 : index
    %c0_54 = arith.constant 0 : index
    %151 = vector.load %arg4[%c0_53, %c0_54] : memref<16x16xf32, #tpu.memory_space<vmem>>, vector<16x16xf32>
    %cst_55 = arith.constant dense<0.000000e+00> : vector<16x256xf32>
    %152 = tpu.matmul %151, %150, %cst_55 {dimension_numbers = #tpu.dot_dimension_numbers<[1], [0], [0], [1], [0, 0, 1, 1], [], []>} : vector<16x16xf32>, vector<16x256xf32>, vector<16x256xf32> -> vector<16x256xf32>
    %c0_56 = arith.constant 0 : index
    %c0_57 = arith.constant 0 : index
    %153 = vector.load %arg5[%c0_56, %c0_57] : memref<16x1xf32, #tpu.memory_space<vmem>>, vector<16x1xf32>
    %154 = vector.broadcast %153 : vector<16x1xf32> to vector<16x256xf32>
    %155 = arith.addf %152, %154 : vector<16x256xf32>
    %c0_58 = arith.constant 0 : index
    %c0_59 = arith.constant 0 : index
    %156 = vector.load %arg6[%c0_58, %c0_59] : memref<16x25xf32, #tpu.memory_space<vmem>>, vector<16x25xf32>
    %c0_60 = arith.constant 0 : index
    %c0_61 = arith.constant 0 : index
    %157 = vector.load %arg7[%c0_60, %c0_61] : memref<16x1xf32, #tpu.memory_space<vmem>>, vector<16x1xf32>
    %cst_62 = arith.constant 0.000000e+00 : f32
    %158 = vector.broadcast %cst_62 : f32 to vector<16x128xf32>
    %c0_63 = arith.constant 0 : index
    %c0_64 = arith.constant 0 : index
    %159 = vector.load %arg11[%c0_63, %c0_64] : memref<16x512xf32, #tpu.memory_space<vmem>>, vector<16x128xf32>
    tpu.vector_store %arg11[%c0_63, %c0_64], %158 {strides = array<i32>} : memref<16x512xf32, #tpu.memory_space<vmem>>, vector<16x128xf32>,
    %c0_65 = arith.constant 0 : index
    %c384_66 = arith.constant 384 : index
    %160 = vector.load %arg11[%c0_65, %c384_66] : memref<16x512xf32, #tpu.memory_space<vmem>>, vector<16x128xf32>
    tpu.vector_store %arg11[%c0_65, %c384_66], %158 {strides = array<i32>} : memref<16x512xf32, #tpu.memory_space<vmem>>, vector<16x128xf32>,
    %c0_67 = arith.constant 0 : index
    %c128_68 = arith.constant 128 : index
    %161 = vector.load %arg11[%c0_67, %c128_68] : memref<16x512xf32, #tpu.memory_space<vmem>>, vector<16x256xf32>
    tpu.vector_store %arg11[%c0_67, %c128_68], %155 {strides = array<i32>} : memref<16x512xf32, #tpu.memory_space<vmem>>, vector<16x256xf32>,
    %162 = tpu.iota {dimensions = array<i32: 1>} : vector<1x256xi32>
    %c16_i32_69 = arith.constant 16 : i32
    %c0_i32_70 = arith.constant 0 : i32
    %163 = arith.cmpi eq, %c16_i32_69, %c0_i32_70 : i32
    %c1_i32_71 = arith.constant 1 : i32
    %164 = arith.select %163, %c1_i32_71, %c16_i32_69 : i32
    %165 = vector.broadcast %164 : i32 to vector<1x256xi32>
    %166 = arith.remsi %162, %165 : vector<1x256xi32>
    %c0_i32_72 = arith.constant 0 : i32
    %167 = vector.broadcast %c0_i32_72 : i32 to vector<1x256xi32>
    %168 = arith.cmpi ne, %166, %167 : vector<1x256xi32>
    %c0_i32_73 = arith.constant 0 : i32
    %169 = vector.broadcast %c0_i32_73 : i32 to vector<1x256xi32>
    %170 = arith.cmpi slt, %166, %169 : vector<1x256xi32>
    %c0_i32_74 = arith.constant 0 : i32
    %171 = arith.cmpi slt, %164, %c0_i32_74 : i32
    %172 = vector.broadcast %171 : i1 to vector<1x256xi1>
    %173 = vector.broadcast %172 : vector<1x256xi1> to vector<1x256xi1>
    %174 = arith.xori %170, %173 : vector<1x256xi1>
    %175 = arith.andi %174, %168 : vector<1x256xi1>
    %176 = vector.broadcast %164 : i32 to vector<1x256xi32>
    %177 = arith.addi %166, %176 : vector<1x256xi32>
    %178 = arith.select %175, %177, %166 : vector<1x256xi1>, vector<1x256xi32>
    %cst_75 = arith.constant 0.000000e+00 : f32
    %179 = vector.broadcast %cst_75 : f32 to vector<16x256xf32>
    %c0_76 = arith.constant 0 : index
    %c94 = arith.constant 94 : index
    %180 = vector.load %arg11[%c0_76, %c94] : memref<16x512xf32, #tpu.memory_space<vmem>>, vector<16x256xf32>
    %c-2_i32 = arith.constant -2 : i32
    %181 = vector.broadcast %c-2_i32 : i32 to vector<1x256xi32>
    %182 = arith.addi %178, %181 : vector<1x256xi32>
    %c0_i32_77 = arith.constant 0 : i32
    %183 = vector.broadcast %c0_i32_77 : i32 to vector<1x256xi32>
    %184 = arith.cmpi sge, %182, %183 : vector<1x256xi32>
    %c-2_i32_78 = arith.constant -2 : i32
    %185 = vector.broadcast %c-2_i32_78 : i32 to vector<1x256xi32>
    %186 = arith.addi %178, %185 : vector<1x256xi32>
    %c16_i32_79 = arith.constant 16 : i32
    %187 = vector.broadcast %c16_i32_79 : i32 to vector<1x256xi32>
    %188 = arith.cmpi slt, %186, %187 : vector<1x256xi32>
    %189 = arith.andi %184, %188 : vector<1x256xi1>
    %cst_80 = arith.constant 0.000000e+00 : f32
    %190 = vector.shape_cast %189 : vector<1x256xi1> to vector<1x256xi1>
    %191 = vector.broadcast %190 : vector<1x256xi1> to vector<16x256xi1>
    %192 = vector.broadcast %cst_80 : f32 to vector<16x256xf32>
    %193 = arith.select %191, %180, %192 : vector<16x256xi1>, vector<16x256xf32>
    %194 = vector.extract_strided_slice %156 {offsets = [0, 0], sizes = [16, 1], strides = [1, 1]} : vector<16x25xf32> to vector<16x1xf32>
    %195 = vector.broadcast %194 : vector<16x1xf32> to vector<16x256xf32>
    %196 = arith.mulf %193, %195 : vector<16x256xf32>
    %197 = arith.addf %179, %196 : vector<16x256xf32>
    %c0_81 = arith.constant 0 : index
    %c95 = arith.constant 95 : index
    %198 = vector.load %arg11[%c0_81, %c95] : memref<16x512xf32, #tpu.memory_space<vmem>>, vector<16x256xf32>
    %c-1_i32_82 = arith.constant -1 : i32
    %199 = vector.broadcast %c-1_i32_82 : i32 to vector<1x256xi32>
    %200 = arith.addi %178, %199 : vector<1x256xi32>
    %c0_i32_83 = arith.constant 0 : i32
    %201 = vector.broadcast %c0_i32_83 : i32 to vector<1x256xi32>
    %202 = arith.cmpi sge, %200, %201 : vector<1x256xi32>
    %c-1_i32_84 = arith.constant -1 : i32
    %203 = vector.broadcast %c-1_i32_84 : i32 to vector<1x256xi32>
    %204 = arith.addi %178, %203 : vector<1x256xi32>
    %c16_i32_85 = arith.constant 16 : i32
    %205 = vector.broadcast %c16_i32_85 : i32 to vector<1x256xi32>
    %206 = arith.cmpi slt, %204, %205 : vector<1x256xi32>
    %207 = arith.andi %202, %206 : vector<1x256xi1>
    %cst_86 = arith.constant 0.000000e+00 : f32
    %208 = vector.shape_cast %207 : vector<1x256xi1> to vector<1x256xi1>
    %209 = vector.broadcast %208 : vector<1x256xi1> to vector<16x256xi1>
    %210 = vector.broadcast %cst_86 : f32 to vector<16x256xf32>
    %211 = arith.select %209, %198, %210 : vector<16x256xi1>, vector<16x256xf32>
    %212 = vector.extract_strided_slice %156 {offsets = [0, 1], sizes = [16, 1], strides = [1, 1]} : vector<16x25xf32> to vector<16x1xf32>
    %213 = vector.broadcast %212 : vector<16x1xf32> to vector<16x256xf32>
    %214 = arith.mulf %211, %213 : vector<16x256xf32>
    %215 = arith.addf %197, %214 : vector<16x256xf32>
    %c0_87 = arith.constant 0 : index
    %c96 = arith.constant 96 : index
    %216 = vector.load %arg11[%c0_87, %c96] : memref<16x512xf32, #tpu.memory_space<vmem>>, vector<16x256xf32>
    %217 = vector.extract_strided_slice %156 {offsets = [0, 2], sizes = [16, 1], strides = [1, 1]} : vector<16x25xf32> to vector<16x1xf32>
    %218 = vector.broadcast %217 : vector<16x1xf32> to vector<16x256xf32>
    %219 = arith.mulf %216, %218 : vector<16x256xf32>
    %220 = arith.addf %215, %219 : vector<16x256xf32>
    %c0_88 = arith.constant 0 : index
    %c97 = arith.constant 97 : index
    %221 = vector.load %arg11[%c0_88, %c97] : memref<16x512xf32, #tpu.memory_space<vmem>>, vector<16x256xf32>
    %c1_i32_89 = arith.constant 1 : i32
    %222 = vector.broadcast %c1_i32_89 : i32 to vector<1x256xi32>
    %223 = arith.addi %178, %222 : vector<1x256xi32>
    %c0_i32_90 = arith.constant 0 : i32
    %224 = vector.broadcast %c0_i32_90 : i32 to vector<1x256xi32>
    %225 = arith.cmpi sge, %223, %224 : vector<1x256xi32>
    %c1_i32_91 = arith.constant 1 : i32
    %226 = vector.broadcast %c1_i32_91 : i32 to vector<1x256xi32>
    %227 = arith.addi %178, %226 : vector<1x256xi32>
    %c16_i32_92 = arith.constant 16 : i32
    %228 = vector.broadcast %c16_i32_92 : i32 to vector<1x256xi32>
    %229 = arith.cmpi slt, %227, %228 : vector<1x256xi32>
    %230 = arith.andi %225, %229 : vector<1x256xi1>
    %cst_93 = arith.constant 0.000000e+00 : f32
    %231 = vector.shape_cast %230 : vector<1x256xi1> to vector<1x256xi1>
    %232 = vector.broadcast %231 : vector<1x256xi1> to vector<16x256xi1>
    %233 = vector.broadcast %cst_93 : f32 to vector<16x256xf32>
    %234 = arith.select %232, %221, %233 : vector<16x256xi1>, vector<16x256xf32>
    %235 = vector.extract_strided_slice %156 {offsets = [0, 3], sizes = [16, 1], strides = [1, 1]} : vector<16x25xf32> to vector<16x1xf32>
    %236 = vector.broadcast %235 : vector<16x1xf32> to vector<16x256xf32>
    %237 = arith.mulf %234, %236 : vector<16x256xf32>
    %238 = arith.addf %220, %237 : vector<16x256xf32>
    %c0_94 = arith.constant 0 : index
    %c98 = arith.constant 98 : index
    %239 = vector.load %arg11[%c0_94, %c98] : memref<16x512xf32, #tpu.memory_space<vmem>>, vector<16x256xf32>
    %c2_i32 = arith.constant 2 : i32
    %240 = vector.broadcast %c2_i32 : i32 to vector<1x256xi32>
    %241 = arith.addi %178, %240 : vector<1x256xi32>
    %c0_i32_95 = arith.constant 0 : i32
    %242 = vector.broadcast %c0_i32_95 : i32 to vector<1x256xi32>
    %243 = arith.cmpi sge, %241, %242 : vector<1x256xi32>
    %c2_i32_96 = arith.constant 2 : i32
    %244 = vector.broadcast %c2_i32_96 : i32 to vector<1x256xi32>
    %245 = arith.addi %178, %244 : vector<1x256xi32>
    %c16_i32_97 = arith.constant 16 : i32
    %246 = vector.broadcast %c16_i32_97 : i32 to vector<1x256xi32>
    %247 = arith.cmpi slt, %245, %246 : vector<1x256xi32>
    %248 = arith.andi %243, %247 : vector<1x256xi1>
    %cst_98 = arith.constant 0.000000e+00 : f32
    %249 = vector.shape_cast %248 : vector<1x256xi1> to vector<1x256xi1>
    %250 = vector.broadcast %249 : vector<1x256xi1> to vector<16x256xi1>
    %251 = vector.broadcast %cst_98 : f32 to vector<16x256xf32>
    %252 = arith.select %250, %239, %251 : vector<16x256xi1>, vector<16x256xf32>
    %253 = vector.extract_strided_slice %156 {offsets = [0, 4], sizes = [16, 1], strides = [1, 1]} : vector<16x25xf32> to vector<16x1xf32>
    %254 = vector.broadcast %253 : vector<16x1xf32> to vector<16x256xf32>
    %255 = arith.mulf %252, %254 : vector<16x256xf32>
    %256 = arith.addf %238, %255 : vector<16x256xf32>
    %c0_99 = arith.constant 0 : index
    %c110 = arith.constant 110 : index
    %257 = vector.load %arg11[%c0_99, %c110] : memref<16x512xf32, #tpu.memory_space<vmem>>, vector<16x256xf32>
    %c-2_i32_100 = arith.constant -2 : i32
    %258 = vector.broadcast %c-2_i32_100 : i32 to vector<1x256xi32>
    %259 = arith.addi %178, %258 : vector<1x256xi32>
    %c0_i32_101 = arith.constant 0 : i32
    %260 = vector.broadcast %c0_i32_101 : i32 to vector<1x256xi32>
    %261 = arith.cmpi sge, %259, %260 : vector<1x256xi32>
    %c-2_i32_102 = arith.constant -2 : i32
    %262 = vector.broadcast %c-2_i32_102 : i32 to vector<1x256xi32>
    %263 = arith.addi %178, %262 : vector<1x256xi32>
    %c16_i32_103 = arith.constant 16 : i32
    %264 = vector.broadcast %c16_i32_103 : i32 to vector<1x256xi32>
    %265 = arith.cmpi slt, %263, %264 : vector<1x256xi32>
    %266 = arith.andi %261, %265 : vector<1x256xi1>
    %cst_104 = arith.constant 0.000000e+00 : f32
    %267 = vector.shape_cast %266 : vector<1x256xi1> to vector<1x256xi1>
    %268 = vector.broadcast %267 : vector<1x256xi1> to vector<16x256xi1>
    %269 = vector.broadcast %cst_104 : f32 to vector<16x256xf32>
    %270 = arith.select %268, %257, %269 : vector<16x256xi1>, vector<16x256xf32>
    %271 = vector.extract_strided_slice %156 {offsets = [0, 5], sizes = [16, 1], strides = [1, 1]} : vector<16x25xf32> to vector<16x1xf32>
    %272 = vector.broadcast %271 : vector<16x1xf32> to vector<16x256xf32>
    %273 = arith.mulf %270, %272 : vector<16x256xf32>
    %274 = arith.addf %256, %273 : vector<16x256xf32>
    %c0_105 = arith.constant 0 : index
    %c111_106 = arith.constant 111 : index
    %275 = vector.load %arg11[%c0_105, %c111_106] : memref<16x512xf32, #tpu.memory_space<vmem>>, vector<16x256xf32>
    %c-1_i32_107 = arith.constant -1 : i32
    %276 = vector.broadcast %c-1_i32_107 : i32 to vector<1x256xi32>
    %277 = arith.addi %178, %276 : vector<1x256xi32>
    %c0_i32_108 = arith.constant 0 : i32
    %278 = vector.broadcast %c0_i32_108 : i32 to vector<1x256xi32>
    %279 = arith.cmpi sge, %277, %278 : vector<1x256xi32>
    %c-1_i32_109 = arith.constant -1 : i32
    %280 = vector.broadcast %c-1_i32_109 : i32 to vector<1x256xi32>
    %281 = arith.addi %178, %280 : vector<1x256xi32>
    %c16_i32_110 = arith.constant 16 : i32
    %282 = vector.broadcast %c16_i32_110 : i32 to vector<1x256xi32>
    %283 = arith.cmpi slt, %281, %282 : vector<1x256xi32>
    %284 = arith.andi %279, %283 : vector<1x256xi1>
    %cst_111 = arith.constant 0.000000e+00 : f32
    %285 = vector.shape_cast %284 : vector<1x256xi1> to vector<1x256xi1>
    %286 = vector.broadcast %285 : vector<1x256xi1> to vector<16x256xi1>
    %287 = vector.broadcast %cst_111 : f32 to vector<16x256xf32>
    %288 = arith.select %286, %275, %287 : vector<16x256xi1>, vector<16x256xf32>
    %289 = vector.extract_strided_slice %156 {offsets = [0, 6], sizes = [16, 1], strides = [1, 1]} : vector<16x25xf32> to vector<16x1xf32>
    %290 = vector.broadcast %289 : vector<16x1xf32> to vector<16x256xf32>
    %291 = arith.mulf %288, %290 : vector<16x256xf32>
    %292 = arith.addf %274, %291 : vector<16x256xf32>
    %c0_112 = arith.constant 0 : index
    %c112_113 = arith.constant 112 : index
    %293 = vector.load %arg11[%c0_112, %c112_113] : memref<16x512xf32, #tpu.memory_space<vmem>>, vector<16x256xf32>
    %294 = vector.extract_strided_slice %156 {offsets = [0, 7], sizes = [16, 1], strides = [1, 1]} : vector<16x25xf32> to vector<16x1xf32>
    %295 = vector.broadcast %294 : vector<16x1xf32> to vector<16x256xf32>
    %296 = arith.mulf %293, %295 : vector<16x256xf32>
    %297 = arith.addf %292, %296 : vector<16x256xf32>
    %c0_114 = arith.constant 0 : index
    %c113_115 = arith.constant 113 : index
    %298 = vector.load %arg11[%c0_114, %c113_115] : memref<16x512xf32, #tpu.memory_space<vmem>>, vector<16x256xf32>
    %c1_i32_116 = arith.constant 1 : i32
    %299 = vector.broadcast %c1_i32_116 : i32 to vector<1x256xi32>
    %300 = arith.addi %178, %299 : vector<1x256xi32>
    %c0_i32_117 = arith.constant 0 : i32
    %301 = vector.broadcast %c0_i32_117 : i32 to vector<1x256xi32>
    %302 = arith.cmpi sge, %300, %301 : vector<1x256xi32>
    %c1_i32_118 = arith.constant 1 : i32
    %303 = vector.broadcast %c1_i32_118 : i32 to vector<1x256xi32>
    %304 = arith.addi %178, %303 : vector<1x256xi32>
    %c16_i32_119 = arith.constant 16 : i32
    %305 = vector.broadcast %c16_i32_119 : i32 to vector<1x256xi32>
    %306 = arith.cmpi slt, %304, %305 : vector<1x256xi32>
    %307 = arith.andi %302, %306 : vector<1x256xi1>
    %cst_120 = arith.constant 0.000000e+00 : f32
    %308 = vector.shape_cast %307 : vector<1x256xi1> to vector<1x256xi1>
    %309 = vector.broadcast %308 : vector<1x256xi1> to vector<16x256xi1>
    %310 = vector.broadcast %cst_120 : f32 to vector<16x256xf32>
    %311 = arith.select %309, %298, %310 : vector<16x256xi1>, vector<16x256xf32>
    %312 = vector.extract_strided_slice %156 {offsets = [0, 8], sizes = [16, 1], strides = [1, 1]} : vector<16x25xf32> to vector<16x1xf32>
    %313 = vector.broadcast %312 : vector<16x1xf32> to vector<16x256xf32>
    %314 = arith.mulf %311, %313 : vector<16x256xf32>
    %315 = arith.addf %297, %314 : vector<16x256xf32>
    %c0_121 = arith.constant 0 : index
    %c114 = arith.constant 114 : index
    %316 = vector.load %arg11[%c0_121, %c114] : memref<16x512xf32, #tpu.memory_space<vmem>>, vector<16x256xf32>
    %c2_i32_122 = arith.constant 2 : i32
    %317 = vector.broadcast %c2_i32_122 : i32 to vector<1x256xi32>
    %318 = arith.addi %178, %317 : vector<1x256xi32>
    %c0_i32_123 = arith.constant 0 : i32
    %319 = vector.broadcast %c0_i32_123 : i32 to vector<1x256xi32>
    %320 = arith.cmpi sge, %318, %319 : vector<1x256xi32>
    %c2_i32_124 = arith.constant 2 : i32
    %321 = vector.broadcast %c2_i32_124 : i32 to vector<1x256xi32>
    %322 = arith.addi %178, %321 : vector<1x256xi32>
    %c16_i32_125 = arith.constant 16 : i32
    %323 = vector.broadcast %c16_i32_125 : i32 to vector<1x256xi32>
    %324 = arith.cmpi slt, %322, %323 : vector<1x256xi32>
    %325 = arith.andi %320, %324 : vector<1x256xi1>
    %cst_126 = arith.constant 0.000000e+00 : f32
    %326 = vector.shape_cast %325 : vector<1x256xi1> to vector<1x256xi1>
    %327 = vector.broadcast %326 : vector<1x256xi1> to vector<16x256xi1>
    %328 = vector.broadcast %cst_126 : f32 to vector<16x256xf32>
    %329 = arith.select %327, %316, %328 : vector<16x256xi1>, vector<16x256xf32>
    %330 = vector.extract_strided_slice %156 {offsets = [0, 9], sizes = [16, 1], strides = [1, 1]} : vector<16x25xf32> to vector<16x1xf32>
    %331 = vector.broadcast %330 : vector<16x1xf32> to vector<16x256xf32>
    %332 = arith.mulf %329, %331 : vector<16x256xf32>
    %333 = arith.addf %315, %332 : vector<16x256xf32>
    %c0_127 = arith.constant 0 : index
    %c126 = arith.constant 126 : index
    %334 = vector.load %arg11[%c0_127, %c126] : memref<16x512xf32, #tpu.memory_space<vmem>>, vector<16x256xf32>
    %c-2_i32_128 = arith.constant -2 : i32
    %335 = vector.broadcast %c-2_i32_128 : i32 to vector<1x256xi32>
    %336 = arith.addi %178, %335 : vector<1x256xi32>
    %c0_i32_129 = arith.constant 0 : i32
    %337 = vector.broadcast %c0_i32_129 : i32 to vector<1x256xi32>
    %338 = arith.cmpi sge, %336, %337 : vector<1x256xi32>
    %c-2_i32_130 = arith.constant -2 : i32
    %339 = vector.broadcast %c-2_i32_130 : i32 to vector<1x256xi32>
    %340 = arith.addi %178, %339 : vector<1x256xi32>
    %c16_i32_131 = arith.constant 16 : i32
    %341 = vector.broadcast %c16_i32_131 : i32 to vector<1x256xi32>
    %342 = arith.cmpi slt, %340, %341 : vector<1x256xi32>
    %343 = arith.andi %338, %342 : vector<1x256xi1>
    %cst_132 = arith.constant 0.000000e+00 : f32
    %344 = vector.shape_cast %343 : vector<1x256xi1> to vector<1x256xi1>
    %345 = vector.broadcast %344 : vector<1x256xi1> to vector<16x256xi1>
    %346 = vector.broadcast %cst_132 : f32 to vector<16x256xf32>
    %347 = arith.select %345, %334, %346 : vector<16x256xi1>, vector<16x256xf32>
    %348 = vector.extract_strided_slice %156 {offsets = [0, 10], sizes = [16, 1], strides = [1, 1]} : vector<16x25xf32> to vector<16x1xf32>
    %349 = vector.broadcast %348 : vector<16x1xf32> to vector<16x256xf32>
    %350 = arith.mulf %347, %349 : vector<16x256xf32>
    %351 = arith.addf %333, %350 : vector<16x256xf32>
    %c0_133 = arith.constant 0 : index
    %c127_134 = arith.constant 127 : index
    %352 = vector.load %arg11[%c0_133, %c127_134] : memref<16x512xf32, #tpu.memory_space<vmem>>, vector<16x256xf32>
    %c-1_i32_135 = arith.constant -1 : i32
    %353 = vector.broadcast %c-1_i32_135 : i32 to vector<1x256xi32>
    %354 = arith.addi %178, %353 : vector<1x256xi32>
    %c0_i32_136 = arith.constant 0 : i32
    %355 = vector.broadcast %c0_i32_136 : i32 to vector<1x256xi32>
    %356 = arith.cmpi sge, %354, %355 : vector<1x256xi32>
    %c-1_i32_137 = arith.constant -1 : i32
    %357 = vector.broadcast %c-1_i32_137 : i32 to vector<1x256xi32>
    %358 = arith.addi %178, %357 : vector<1x256xi32>
    %c16_i32_138 = arith.constant 16 : i32
    %359 = vector.broadcast %c16_i32_138 : i32 to vector<1x256xi32>
    %360 = arith.cmpi slt, %358, %359 : vector<1x256xi32>
    %361 = arith.andi %356, %360 : vector<1x256xi1>
    %cst_139 = arith.constant 0.000000e+00 : f32
    %362 = vector.shape_cast %361 : vector<1x256xi1> to vector<1x256xi1>
    %363 = vector.broadcast %362 : vector<1x256xi1> to vector<16x256xi1>
    %364 = vector.broadcast %cst_139 : f32 to vector<16x256xf32>
    %365 = arith.select %363, %352, %364 : vector<16x256xi1>, vector<16x256xf32>
    %366 = vector.extract_strided_slice %156 {offsets = [0, 11], sizes = [16, 1], strides = [1, 1]} : vector<16x25xf32> to vector<16x1xf32>
    %367 = vector.broadcast %366 : vector<16x1xf32> to vector<16x256xf32>
    %368 = arith.mulf %365, %367 : vector<16x256xf32>
    %369 = arith.addf %351, %368 : vector<16x256xf32>
    %c0_140 = arith.constant 0 : index
    %c128_141 = arith.constant 128 : index
    %370 = vector.load %arg11[%c0_140, %c128_141] : memref<16x512xf32, #tpu.memory_space<vmem>>, vector<16x256xf32>
    %371 = vector.extract_strided_slice %156 {offsets = [0, 12], sizes = [16, 1], strides = [1, 1]} : vector<16x25xf32> to vector<16x1xf32>
    %372 = vector.broadcast %371 : vector<16x1xf32> to vector<16x256xf32>
    %373 = arith.mulf %370, %372 : vector<16x256xf32>
    %374 = arith.addf %369, %373 : vector<16x256xf32>
    %c0_142 = arith.constant 0 : index
    %c129_143 = arith.constant 129 : index
    %375 = vector.load %arg11[%c0_142, %c129_143] : memref<16x512xf32, #tpu.memory_space<vmem>>, vector<16x256xf32>
    %c1_i32_144 = arith.constant 1 : i32
    %376 = vector.broadcast %c1_i32_144 : i32 to vector<1x256xi32>
    %377 = arith.addi %178, %376 : vector<1x256xi32>
    %c0_i32_145 = arith.constant 0 : i32
    %378 = vector.broadcast %c0_i32_145 : i32 to vector<1x256xi32>
    %379 = arith.cmpi sge, %377, %378 : vector<1x256xi32>
    %c1_i32_146 = arith.constant 1 : i32
    %380 = vector.broadcast %c1_i32_146 : i32 to vector<1x256xi32>
    %381 = arith.addi %178, %380 : vector<1x256xi32>
    %c16_i32_147 = arith.constant 16 : i32
    %382 = vector.broadcast %c16_i32_147 : i32 to vector<1x256xi32>
    %383 = arith.cmpi slt, %381, %382 : vector<1x256xi32>
    %384 = arith.andi %379, %383 : vector<1x256xi1>
    %cst_148 = arith.constant 0.000000e+00 : f32
    %385 = vector.shape_cast %384 : vector<1x256xi1> to vector<1x256xi1>
    %386 = vector.broadcast %385 : vector<1x256xi1> to vector<16x256xi1>
    %387 = vector.broadcast %cst_148 : f32 to vector<16x256xf32>
    %388 = arith.select %386, %375, %387 : vector<16x256xi1>, vector<16x256xf32>
    %389 = vector.extract_strided_slice %156 {offsets = [0, 13], sizes = [16, 1], strides = [1, 1]} : vector<16x25xf32> to vector<16x1xf32>
    %390 = vector.broadcast %389 : vector<16x1xf32> to vector<16x256xf32>
    %391 = arith.mulf %388, %390 : vector<16x256xf32>
    %392 = arith.addf %374, %391 : vector<16x256xf32>
    %c0_149 = arith.constant 0 : index
    %c130 = arith.constant 130 : index
    %393 = vector.load %arg11[%c0_149, %c130] : memref<16x512xf32, #tpu.memory_space<vmem>>, vector<16x256xf32>
    %c2_i32_150 = arith.constant 2 : i32
    %394 = vector.broadcast %c2_i32_150 : i32 to vector<1x256xi32>
    %395 = arith.addi %178, %394 : vector<1x256xi32>
    %c0_i32_151 = arith.constant 0 : i32
    %396 = vector.broadcast %c0_i32_151 : i32 to vector<1x256xi32>
    %397 = arith.cmpi sge, %395, %396 : vector<1x256xi32>
    %c2_i32_152 = arith.constant 2 : i32
    %398 = vector.broadcast %c2_i32_152 : i32 to vector<1x256xi32>
    %399 = arith.addi %178, %398 : vector<1x256xi32>
    %c16_i32_153 = arith.constant 16 : i32
    %400 = vector.broadcast %c16_i32_153 : i32 to vector<1x256xi32>
    %401 = arith.cmpi slt, %399, %400 : vector<1x256xi32>
    %402 = arith.andi %397, %401 : vector<1x256xi1>
    %cst_154 = arith.constant 0.000000e+00 : f32
    %403 = vector.shape_cast %402 : vector<1x256xi1> to vector<1x256xi1>
    %404 = vector.broadcast %403 : vector<1x256xi1> to vector<16x256xi1>
    %405 = vector.broadcast %cst_154 : f32 to vector<16x256xf32>
    %406 = arith.select %404, %393, %405 : vector<16x256xi1>, vector<16x256xf32>
    %407 = vector.extract_strided_slice %156 {offsets = [0, 14], sizes = [16, 1], strides = [1, 1]} : vector<16x25xf32> to vector<16x1xf32>
    %408 = vector.broadcast %407 : vector<16x1xf32> to vector<16x256xf32>
    %409 = arith.mulf %406, %408 : vector<16x256xf32>
    %410 = arith.addf %392, %409 : vector<16x256xf32>
    %c0_155 = arith.constant 0 : index
    %c142 = arith.constant 142 : index
    %411 = vector.load %arg11[%c0_155, %c142] : memref<16x512xf32, #tpu.memory_space<vmem>>, vector<16x256xf32>
    %c-2_i32_156 = arith.constant -2 : i32
    %412 = vector.broadcast %c-2_i32_156 : i32 to vector<1x256xi32>
    %413 = arith.addi %178, %412 : vector<1x256xi32>
    %c0_i32_157 = arith.constant 0 : i32
    %414 = vector.broadcast %c0_i32_157 : i32 to vector<1x256xi32>
    %415 = arith.cmpi sge, %413, %414 : vector<1x256xi32>
    %c-2_i32_158 = arith.constant -2 : i32
    %416 = vector.broadcast %c-2_i32_158 : i32 to vector<1x256xi32>
    %417 = arith.addi %178, %416 : vector<1x256xi32>
    %c16_i32_159 = arith.constant 16 : i32
    %418 = vector.broadcast %c16_i32_159 : i32 to vector<1x256xi32>
    %419 = arith.cmpi slt, %417, %418 : vector<1x256xi32>
    %420 = arith.andi %415, %419 : vector<1x256xi1>
    %cst_160 = arith.constant 0.000000e+00 : f32
    %421 = vector.shape_cast %420 : vector<1x256xi1> to vector<1x256xi1>
    %422 = vector.broadcast %421 : vector<1x256xi1> to vector<16x256xi1>
    %423 = vector.broadcast %cst_160 : f32 to vector<16x256xf32>
    %424 = arith.select %422, %411, %423 : vector<16x256xi1>, vector<16x256xf32>
    %425 = vector.extract_strided_slice %156 {offsets = [0, 15], sizes = [16, 1], strides = [1, 1]} : vector<16x25xf32> to vector<16x1xf32>
    %426 = vector.broadcast %425 : vector<16x1xf32> to vector<16x256xf32>
    %427 = arith.mulf %424, %426 : vector<16x256xf32>
    %428 = arith.addf %410, %427 : vector<16x256xf32>
    %c0_161 = arith.constant 0 : index
    %c143_162 = arith.constant 143 : index
    %429 = vector.load %arg11[%c0_161, %c143_162] : memref<16x512xf32, #tpu.memory_space<vmem>>, vector<16x256xf32>
    %c-1_i32_163 = arith.constant -1 : i32
    %430 = vector.broadcast %c-1_i32_163 : i32 to vector<1x256xi32>
    %431 = arith.addi %178, %430 : vector<1x256xi32>
    %c0_i32_164 = arith.constant 0 : i32
    %432 = vector.broadcast %c0_i32_164 : i32 to vector<1x256xi32>
    %433 = arith.cmpi sge, %431, %432 : vector<1x256xi32>
    %c-1_i32_165 = arith.constant -1 : i32
    %434 = vector.broadcast %c-1_i32_165 : i32 to vector<1x256xi32>
    %435 = arith.addi %178, %434 : vector<1x256xi32>
    %c16_i32_166 = arith.constant 16 : i32
    %436 = vector.broadcast %c16_i32_166 : i32 to vector<1x256xi32>
    %437 = arith.cmpi slt, %435, %436 : vector<1x256xi32>
    %438 = arith.andi %433, %437 : vector<1x256xi1>
    %cst_167 = arith.constant 0.000000e+00 : f32
    %439 = vector.shape_cast %438 : vector<1x256xi1> to vector<1x256xi1>
    %440 = vector.broadcast %439 : vector<1x256xi1> to vector<16x256xi1>
    %441 = vector.broadcast %cst_167 : f32 to vector<16x256xf32>
    %442 = arith.select %440, %429, %441 : vector<16x256xi1>, vector<16x256xf32>
    %443 = vector.extract_strided_slice %156 {offsets = [0, 16], sizes = [16, 1], strides = [1, 1]} : vector<16x25xf32> to vector<16x1xf32>
    %444 = vector.broadcast %443 : vector<16x1xf32> to vector<16x256xf32>
    %445 = arith.mulf %442, %444 : vector<16x256xf32>
    %446 = arith.addf %428, %445 : vector<16x256xf32>
    %c0_168 = arith.constant 0 : index
    %c144_169 = arith.constant 144 : index
    %447 = vector.load %arg11[%c0_168, %c144_169] : memref<16x512xf32, #tpu.memory_space<vmem>>, vector<16x256xf32>
    %448 = vector.extract_strided_slice %156 {offsets = [0, 17], sizes = [16, 1], strides = [1, 1]} : vector<16x25xf32> to vector<16x1xf32>
    %449 = vector.broadcast %448 : vector<16x1xf32> to vector<16x256xf32>
    %450 = arith.mulf %447, %449 : vector<16x256xf32>
    %451 = arith.addf %446, %450 : vector<16x256xf32>
    %c0_170 = arith.constant 0 : index
    %c145_171 = arith.constant 145 : index
    %452 = vector.load %arg11[%c0_170, %c145_171] : memref<16x512xf32, #tpu.memory_space<vmem>>, vector<16x256xf32>
    %c1_i32_172 = arith.constant 1 : i32
    %453 = vector.broadcast %c1_i32_172 : i32 to vector<1x256xi32>
    %454 = arith.addi %178, %453 : vector<1x256xi32>
    %c0_i32_173 = arith.constant 0 : i32
    %455 = vector.broadcast %c0_i32_173 : i32 to vector<1x256xi32>
    %456 = arith.cmpi sge, %454, %455 : vector<1x256xi32>
    %c1_i32_174 = arith.constant 1 : i32
    %457 = vector.broadcast %c1_i32_174 : i32 to vector<1x256xi32>
    %458 = arith.addi %178, %457 : vector<1x256xi32>
    %c16_i32_175 = arith.constant 16 : i32
    %459 = vector.broadcast %c16_i32_175 : i32 to vector<1x256xi32>
    %460 = arith.cmpi slt, %458, %459 : vector<1x256xi32>
    %461 = arith.andi %456, %460 : vector<1x256xi1>
    %cst_176 = arith.constant 0.000000e+00 : f32
    %462 = vector.shape_cast %461 : vector<1x256xi1> to vector<1x256xi1>
    %463 = vector.broadcast %462 : vector<1x256xi1> to vector<16x256xi1>
    %464 = vector.broadcast %cst_176 : f32 to vector<16x256xf32>
    %465 = arith.select %463, %452, %464 : vector<16x256xi1>, vector<16x256xf32>
    %466 = vector.extract_strided_slice %156 {offsets = [0, 18], sizes = [16, 1], strides = [1, 1]} : vector<16x25xf32> to vector<16x1xf32>
    %467 = vector.broadcast %466 : vector<16x1xf32> to vector<16x256xf32>
    %468 = arith.mulf %465, %467 : vector<16x256xf32>
    %469 = arith.addf %451, %468 : vector<16x256xf32>
    %c0_177 = arith.constant 0 : index
    %c146 = arith.constant 146 : index
    %470 = vector.load %arg11[%c0_177, %c146] : memref<16x512xf32, #tpu.memory_space<vmem>>, vector<16x256xf32>
    %c2_i32_178 = arith.constant 2 : i32
    %471 = vector.broadcast %c2_i32_178 : i32 to vector<1x256xi32>
    %472 = arith.addi %178, %471 : vector<1x256xi32>
    %c0_i32_179 = arith.constant 0 : i32
    %473 = vector.broadcast %c0_i32_179 : i32 to vector<1x256xi32>
    %474 = arith.cmpi sge, %472, %473 : vector<1x256xi32>
    %c2_i32_180 = arith.constant 2 : i32
    %475 = vector.broadcast %c2_i32_180 : i32 to vector<1x256xi32>
    %476 = arith.addi %178, %475 : vector<1x256xi32>
    %c16_i32_181 = arith.constant 16 : i32
    %477 = vector.broadcast %c16_i32_181 : i32 to vector<1x256xi32>
    %478 = arith.cmpi slt, %476, %477 : vector<1x256xi32>
    %479 = arith.andi %474, %478 : vector<1x256xi1>
    %cst_182 = arith.constant 0.000000e+00 : f32
    %480 = vector.shape_cast %479 : vector<1x256xi1> to vector<1x256xi1>
    %481 = vector.broadcast %480 : vector<1x256xi1> to vector<16x256xi1>
    %482 = vector.broadcast %cst_182 : f32 to vector<16x256xf32>
    %483 = arith.select %481, %470, %482 : vector<16x256xi1>, vector<16x256xf32>
    %484 = vector.extract_strided_slice %156 {offsets = [0, 19], sizes = [16, 1], strides = [1, 1]} : vector<16x25xf32> to vector<16x1xf32>
    %485 = vector.broadcast %484 : vector<16x1xf32> to vector<16x256xf32>
    %486 = arith.mulf %483, %485 : vector<16x256xf32>
    %487 = arith.addf %469, %486 : vector<16x256xf32>
    %c0_183 = arith.constant 0 : index
    %c158 = arith.constant 158 : index
    %488 = vector.load %arg11[%c0_183, %c158] : memref<16x512xf32, #tpu.memory_space<vmem>>, vector<16x256xf32>
    %c-2_i32_184 = arith.constant -2 : i32
    %489 = vector.broadcast %c-2_i32_184 : i32 to vector<1x256xi32>
    %490 = arith.addi %178, %489 : vector<1x256xi32>
    %c0_i32_185 = arith.constant 0 : i32
    %491 = vector.broadcast %c0_i32_185 : i32 to vector<1x256xi32>
    %492 = arith.cmpi sge, %490, %491 : vector<1x256xi32>
    %c-2_i32_186 = arith.constant -2 : i32
    %493 = vector.broadcast %c-2_i32_186 : i32 to vector<1x256xi32>
    %494 = arith.addi %178, %493 : vector<1x256xi32>
    %c16_i32_187 = arith.constant 16 : i32
    %495 = vector.broadcast %c16_i32_187 : i32 to vector<1x256xi32>
    %496 = arith.cmpi slt, %494, %495 : vector<1x256xi32>
    %497 = arith.andi %492, %496 : vector<1x256xi1>
    %cst_188 = arith.constant 0.000000e+00 : f32
    %498 = vector.shape_cast %497 : vector<1x256xi1> to vector<1x256xi1>
    %499 = vector.broadcast %498 : vector<1x256xi1> to vector<16x256xi1>
    %500 = vector.broadcast %cst_188 : f32 to vector<16x256xf32>
    %501 = arith.select %499, %488, %500 : vector<16x256xi1>, vector<16x256xf32>
    %502 = vector.extract_strided_slice %156 {offsets = [0, 20], sizes = [16, 1], strides = [1, 1]} : vector<16x25xf32> to vector<16x1xf32>
    %503 = vector.broadcast %502 : vector<16x1xf32> to vector<16x256xf32>
    %504 = arith.mulf %501, %503 : vector<16x256xf32>
    %505 = arith.addf %487, %504 : vector<16x256xf32>
    %c0_189 = arith.constant 0 : index
    %c159 = arith.constant 159 : index
    %506 = vector.load %arg11[%c0_189, %c159] : memref<16x512xf32, #tpu.memory_space<vmem>>, vector<16x256xf32>
    %c-1_i32_190 = arith.constant -1 : i32
    %507 = vector.broadcast %c-1_i32_190 : i32 to vector<1x256xi32>
    %508 = arith.addi %178, %507 : vector<1x256xi32>
    %c0_i32_191 = arith.constant 0 : i32
    %509 = vector.broadcast %c0_i32_191 : i32 to vector<1x256xi32>
    %510 = arith.cmpi sge, %508, %509 : vector<1x256xi32>
    %c-1_i32_192 = arith.constant -1 : i32
    %511 = vector.broadcast %c-1_i32_192 : i32 to vector<1x256xi32>
    %512 = arith.addi %178, %511 : vector<1x256xi32>
    %c16_i32_193 = arith.constant 16 : i32
    %513 = vector.broadcast %c16_i32_193 : i32 to vector<1x256xi32>
    %514 = arith.cmpi slt, %512, %513 : vector<1x256xi32>
    %515 = arith.andi %510, %514 : vector<1x256xi1>
    %cst_194 = arith.constant 0.000000e+00 : f32
    %516 = vector.shape_cast %515 : vector<1x256xi1> to vector<1x256xi1>
    %517 = vector.broadcast %516 : vector<1x256xi1> to vector<16x256xi1>
    %518 = vector.broadcast %cst_194 : f32 to vector<16x256xf32>
    %519 = arith.select %517, %506, %518 : vector<16x256xi1>, vector<16x256xf32>
    %520 = vector.extract_strided_slice %156 {offsets = [0, 21], sizes = [16, 1], strides = [1, 1]} : vector<16x25xf32> to vector<16x1xf32>
    %521 = vector.broadcast %520 : vector<16x1xf32> to vector<16x256xf32>
    %522 = arith.mulf %519, %521 : vector<16x256xf32>
    %523 = arith.addf %505, %522 : vector<16x256xf32>
    %c0_195 = arith.constant 0 : index
    %c160 = arith.constant 160 : index
    %524 = vector.load %arg11[%c0_195, %c160] : memref<16x512xf32, #tpu.memory_space<vmem>>, vector<16x256xf32>
    %525 = vector.extract_strided_slice %156 {offsets = [0, 22], sizes = [16, 1], strides = [1, 1]} : vector<16x25xf32> to vector<16x1xf32>
    %526 = vector.broadcast %525 : vector<16x1xf32> to vector<16x256xf32>
    %527 = arith.mulf %524, %526 : vector<16x256xf32>
    %528 = arith.addf %523, %527 : vector<16x256xf32>
    %c0_196 = arith.constant 0 : index
    %c161 = arith.constant 161 : index
    %529 = vector.load %arg11[%c0_196, %c161] : memref<16x512xf32, #tpu.memory_space<vmem>>, vector<16x256xf32>
    %c1_i32_197 = arith.constant 1 : i32
    %530 = vector.broadcast %c1_i32_197 : i32 to vector<1x256xi32>
    %531 = arith.addi %178, %530 : vector<1x256xi32>
    %c0_i32_198 = arith.constant 0 : i32
    %532 = vector.broadcast %c0_i32_198 : i32 to vector<1x256xi32>
    %533 = arith.cmpi sge, %531, %532 : vector<1x256xi32>
    %c1_i32_199 = arith.constant 1 : i32
    %534 = vector.broadcast %c1_i32_199 : i32 to vector<1x256xi32>
    %535 = arith.addi %178, %534 : vector<1x256xi32>
    %c16_i32_200 = arith.constant 16 : i32
    %536 = vector.broadcast %c16_i32_200 : i32 to vector<1x256xi32>
    %537 = arith.cmpi slt, %535, %536 : vector<1x256xi32>
    %538 = arith.andi %533, %537 : vector<1x256xi1>
    %cst_201 = arith.constant 0.000000e+00 : f32
    %539 = vector.shape_cast %538 : vector<1x256xi1> to vector<1x256xi1>
    %540 = vector.broadcast %539 : vector<1x256xi1> to vector<16x256xi1>
    %541 = vector.broadcast %cst_201 : f32 to vector<16x256xf32>
    %542 = arith.select %540, %529, %541 : vector<16x256xi1>, vector<16x256xf32>
    %543 = vector.extract_strided_slice %156 {offsets = [0, 23], sizes = [16, 1], strides = [1, 1]} : vector<16x25xf32> to vector<16x1xf32>
    %544 = vector.broadcast %543 : vector<16x1xf32> to vector<16x256xf32>
    %545 = arith.mulf %542, %544 : vector<16x256xf32>
    %546 = arith.addf %528, %545 : vector<16x256xf32>
    %c0_202 = arith.constant 0 : index
    %c162 = arith.constant 162 : index
    %547 = vector.load %arg11[%c0_202, %c162] : memref<16x512xf32, #tpu.memory_space<vmem>>, vector<16x256xf32>
    %c2_i32_203 = arith.constant 2 : i32
    %548 = vector.broadcast %c2_i32_203 : i32 to vector<1x256xi32>
    %549 = arith.addi %178, %548 : vector<1x256xi32>
    %c0_i32_204 = arith.constant 0 : i32
    %550 = vector.broadcast %c0_i32_204 : i32 to vector<1x256xi32>
    %551 = arith.cmpi sge, %549, %550 : vector<1x256xi32>
    %c2_i32_205 = arith.constant 2 : i32
    %552 = vector.broadcast %c2_i32_205 : i32 to vector<1x256xi32>
    %553 = arith.addi %178, %552 : vector<1x256xi32>
    %c16_i32_206 = arith.constant 16 : i32
    %554 = vector.broadcast %c16_i32_206 : i32 to vector<1x256xi32>
    %555 = arith.cmpi slt, %553, %554 : vector<1x256xi32>
    %556 = arith.andi %551, %555 : vector<1x256xi1>
    %cst_207 = arith.constant 0.000000e+00 : f32
    %557 = vector.shape_cast %556 : vector<1x256xi1> to vector<1x256xi1>
    %558 = vector.broadcast %557 : vector<1x256xi1> to vector<16x256xi1>
    %559 = vector.broadcast %cst_207 : f32 to vector<16x256xf32>
    %560 = arith.select %558, %547, %559 : vector<16x256xi1>, vector<16x256xf32>
    %561 = vector.extract_strided_slice %156 {offsets = [0, 24], sizes = [16, 1], strides = [1, 1]} : vector<16x25xf32> to vector<16x1xf32>
    %562 = vector.broadcast %561 : vector<16x1xf32> to vector<16x256xf32>
    %563 = arith.mulf %560, %562 : vector<16x256xf32>
    %564 = arith.addf %546, %563 : vector<16x256xf32>
    %565 = vector.broadcast %157 : vector<16x1xf32> to vector<16x256xf32>
    %566 = arith.addf %564, %565 : vector<16x256xf32>
    %c0_208 = arith.constant 0 : index
    %c0_209 = arith.constant 0 : index
    %567 = vector.load %arg8[%c0_208, %c0_209] : memref<16x16xf32, #tpu.memory_space<vmem>>, vector<16x16xf32>
    %cst_210 = arith.constant dense<0.000000e+00> : vector<16x256xf32>
    %568 = tpu.matmul %567, %566, %cst_210 {dimension_numbers = #tpu.dot_dimension_numbers<[1], [0], [0], [1], [0, 0, 1, 1], [], []>} : vector<16x16xf32>, vector<16x256xf32>, vector<16x256xf32> -> vector<16x256xf32>
    %c0_211 = arith.constant 0 : index
    %c0_212 = arith.constant 0 : index
    %569 = vector.load %arg9[%c0_211, %c0_212] : memref<16x1xf32, #tpu.memory_space<vmem>>, vector<16x1xf32>
    %570 = vector.broadcast %569 : vector<16x1xf32> to vector<16x256xf32>
    %571 = arith.addf %568, %570 : vector<16x256xf32>
    %c0_213 = arith.constant 0 : index
    %c0_214 = arith.constant 0 : index
    %c0_215 = arith.constant 0 : index
    %572 = vector.load %arg10[%c0_213, %c0_214, %c0_215] : memref<1x16x256xf32, #tpu.memory_space<vmem>>, vector<1x16x256xf32>
    %573 = vector.shape_cast %572 : vector<1x16x256xf32> to vector<16x256xf32>
    %574 = vector.shape_cast %571 : vector<16x256xf32> to vector<1x16x256xf32>
    tpu.vector_store %arg10[%c0_213, %c0_214, %c0_215], %574 {strides = array<i32>} : memref<1x16x256xf32, #tpu.memory_space<vmem>>, vector<1x16x256xf32>,
    return
  }
  func.func @transform_0(%arg0: i32) -> (i32, i32, i32) {
    %c0_i32 = arith.constant 0 : i32
    %c0_i32_0 = arith.constant 0 : i32
    %c0_i32_1 = arith.constant 0 : i32
    return %arg0, %c0_i32, %c0_i32_0 : i32, i32, i32
  }
  func.func @transform_1(%arg0: i32) -> (i32, i32) {
    %c0_i32 = arith.constant 0 : i32
    %c0_i32_0 = arith.constant 0 : i32
    %c0_i32_1 = arith.constant 0 : i32
    return %c0_i32, %c0_i32_0 : i32, i32
  }
  func.func @transform_2(%arg0: i32) -> (i32, i32) {
    %c0_i32 = arith.constant 0 : i32
    %c0_i32_0 = arith.constant 0 : i32
    %c0_i32_1 = arith.constant 0 : i32
    return %c0_i32, %c0_i32_0 : i32, i32
  }
  func.func @transform_3(%arg0: i32) -> (i32, i32) {
    %c0_i32 = arith.constant 0 : i32
    %c0_i32_0 = arith.constant 0 : i32
    %c0_i32_1 = arith.constant 0 : i32
    return %c0_i32, %c0_i32_0 : i32, i32
  }
  func.func @transform_4(%arg0: i32) -> (i32, i32) {
    %c0_i32 = arith.constant 0 : i32
    %c0_i32_0 = arith.constant 0 : i32
    %c0_i32_1 = arith.constant 0 : i32
    return %c0_i32, %c0_i32_0 : i32, i32
  }
  func.func @transform_5(%arg0: i32) -> (i32, i32) {
    %c0_i32 = arith.constant 0 : i32
    %c0_i32_0 = arith.constant 0 : i32
    %c0_i32_1 = arith.constant 0 : i32
    return %c0_i32, %c0_i32_0 : i32, i32
  }
  func.func @transform_6(%arg0: i32) -> (i32, i32) {
    %c0_i32 = arith.constant 0 : i32
    %c0_i32_0 = arith.constant 0 : i32
    %c0_i32_1 = arith.constant 0 : i32
    return %c0_i32, %c0_i32_0 : i32, i32
  }
  func.func @transform_7(%arg0: i32) -> (i32, i32) {
    %c0_i32 = arith.constant 0 : i32
    %c0_i32_0 = arith.constant 0 : i32
    %c0_i32_1 = arith.constant 0 : i32
    return %c0_i32, %c0_i32_0 : i32, i32
  }
  func.func @transform_8(%arg0: i32) -> (i32, i32) {
    %c0_i32 = arith.constant 0 : i32
    %c0_i32_0 = arith.constant 0 : i32
    %c0_i32_1 = arith.constant 0 : i32
    return %c0_i32, %c0_i32_0 : i32, i32
  }
  func.func @transform_9(%arg0: i32) -> (i32, i32, i32) {
    %c0_i32 = arith.constant 0 : i32
    %c0_i32_0 = arith.constant 0 : i32
    %c0_i32_1 = arith.constant 0 : i32
    return %arg0, %c0_i32, %c0_i32_0 : i32, i32, i32
  }
}

</mosaic_0001>

<llo_original>
// kernel: tpu_custom_call.1
$region0: #{tpu_custom_call.1}
  #allocation0 [shape = 'u32[]', space=smem, size = 0x4, offset = 0x4, fixed_abs, tag = 'smem constant byte address 0x4 - core index']
  #allocation1 [shape = 'u32[72,128]{1,0:T(1,128)}', space=vmem, size = 0x9000, scoped, tag = 'internal scratch']
  #allocation2 [shape = 'f32[16,512]{1,0:T(8,128)}', space=vmem, size = 0x8000, scoped, tag = 'scratch operand']
  %s0 = inlined_call_operand.hbm [shape: f32[2,16,256], index: 0, kind: input, shape index: {}]
  %s1 = inlined_call_operand.vmem [shape: f32[16,9], index: 1, kind: input, shape index: {}]
  %s2 = inlined_call_operand.vmem [shape: f32[16,1], index: 2, kind: input, shape index: {}]
  %s3 = inlined_call_operand.vmem [shape: f32[16,16], index: 3, kind: input, shape index: {}]
  %s4 = inlined_call_operand.vmem [shape: f32[16,1], index: 4, kind: input, shape index: {}]
  %s5 = inlined_call_operand.vmem [shape: f32[16,25], index: 5, kind: input, shape index: {}]
  %s6 = inlined_call_operand.vmem [shape: f32[16,1], index: 6, kind: input, shape index: {}]
  %s7 = inlined_call_operand.vmem [shape: f32[16,16], index: 7, kind: input, shape index: {}]
  %s8 = inlined_call_operand.vmem [shape: f32[16,1], index: 8, kind: input, shape index: {}]
  %s9 = inlined_call_operand.hbm [shape: f32[2,16,256], index: 9, kind: output, shape index: {}]
  %s10 = sld [smem:[#allocation0]]
  $region73: #{tpu_custom_call.1} parent=0
    _
  %s12 = ssub.s32 1, %s10
  %s13 = scalar_select 0, %s12, %s10
  $region1: #{tpu_custom_call.1} parent=0
    #allocation3 [shape = 'u8[32768]{0}', space=vmem, size = 0x8000, scoped, tag = 'input window, operand 0']
    #allocation4 [shape = 's32[2]{0}', space=sflag, size = 0x8, scoped, tag = 'scoped memory for tpu_custom_call.1']
    #allocation5 [shape = 's32[2]{0}', space=sflag, size = 0x8, scoped, tag = 'scoped memory for tpu_custom_call.1']
    #allocation6 [shape = 'u8[32768]{0}', space=vmem, size = 0x8000, scoped, tag = 'output window, operand 0']
    %14 = vsyncpa [#allocation4], 0
    %s15 = scalar_lea.sflag [#allocation4], 1
    %16 = vsyncpa %s15, 0
    %17 = vsyncpa [#allocation5], 0
    %s18 = scalar_lea.sflag [#allocation5], 1
    %19 = vsyncpa %s18, 0
    loop: start=0, step=1, limit=4
    $region2: #{tpu_custom_call.1} parent=1 // loop_pre_header
      _
    $region3: #{tpu_custom_call.1} parent=1 // loop_header
      %s21 = sphi 0, %s25
      %p22 = scmp.ge.s32.totalorder %s21, 4
      %s31 = sphi 0, %s33
      %s34 = sphi 0, %s31
      %s35 = sphi 0, %s34
      %s51 = sphi 0, %s35
      %s55 = sphi 0, %s55
      %s57 = sphi 0, %s55
      %s58 = sphi 0, %s57
      %s72 = sphi 0, %s58
      %s76 = sphi 0, %s76
      %s78 = sphi 0, %s76
      %s79 = sphi 0, %s78
      %s93 = sphi 0, %s79
      %s97 = sphi 0, %s97
      %s99 = sphi 0, %s97
      %s100 = sphi 0, %s99
      %s114 = sphi 0, %s100
      %s118 = sphi 0, %s118
      %s120 = sphi 0, %s118
      %s121 = sphi 0, %s120
      %s135 = sphi 0, %s121
      %s139 = sphi 0, %s139
      %s141 = sphi 0, %s139
      %s142 = sphi 0, %s141
      %s156 = sphi 0, %s142
      %s160 = sphi 0, %s160
      %s162 = sphi 0, %s160
      %s163 = sphi 0, %s162
      %s177 = sphi 0, %s163
      %s181 = sphi 0, %s181
      %s183 = sphi 0, %s181
      %s184 = sphi 0, %s183
      %s198 = sphi 0, %s184
      %s202 = sphi 0, %s202
      %s204 = sphi 0, %s202
      %s205 = sphi 0, %s204
      %s219 = sphi 0, %s205
      %s225 = sphi 0, %s227
      %s228 = sphi 0, %s225
      %s229 = sphi 0, %s228
      %s245 = sphi 0, %s229
    $region4: #{tpu_custom_call.1} parent=1 // loop_header_branch
      %24 = sbr.rel (%p22) target = $region8
    $region5: #{tpu_custom_call.1} parent=1 // loop_body
      %s26 = ssub.s32 %s21, 1
      %s27 = ssub.s32 %s21, 2
      %s28 = sadd.s32 %s21, 1
      %s29 = ssub.s32 %s21, %s28
      %p30 = scmp.eq.s32.totalorder %s29, 0
      %s32 = sadd.s32 %s31, 1
      %s33 = scalar_select %p30, %s31, %s32
      %p36 = pneg %p30
      %p37 = scmp.eq.s32.totalorder %s21, 1
      %p38 = por %p36, %p37
      %p39 = scmp.ne.s32.totalorder %s31, %s34
      %p40 = scmp.eq.s32.totalorder %s21, 0
      %p41 = por %p39, %p40
      %p42 = scmp.ne.s32.totalorder %s31, %s34
      %p43 = scmp.eq.s32.totalorder %s26, 1
      %p44 = por %p42, %p43
      %p45 = scmp.ne.s32.totalorder %s34, %s35
      %p46 = scmp.eq.s32.totalorder %s26, 0
      %p47 = por %p45, %p46
      %p48 = scmp.ne.s32.totalorder %s34, %s35
      %p49 = scmp.eq.s32.totalorder %s27, 1
      %p50 = por %p48, %p49
      %p52 = scmp.ne.s32.totalorder %s35, %s51
      %p53 = scmp.eq.s32.totalorder %s27, 0
      %p54 = por %p52, %p53
      %s56 = sadd.s32 %s55, 1
      %p59 = scmp.eq.s32.totalorder %s21, 1
      %p60 = scmp.ne.s32.totalorder %s55, %s57
      %p61 = scmp.eq.s32.totalorder %s21, 0
      %p62 = por %p60, %p61
      %p63 = scmp.ne.s32.totalorder %s55, %s57
      %p64 = scmp.eq.s32.totalorder %s26, 1
      %p65 = por %p63, %p64
      %p66 = scmp.ne.s32.totalorder %s57, %s58
      %p67 = scmp.eq.s32.totalorder %s26, 0
      %p68 = por %p66, %p67
      %p69 = scmp.ne.s32.totalorder %s57, %s58
      %p70 = scmp.eq.s32.totalorder %s27, 1
      %p71 = por %p69, %p70
      %p73 = scmp.ne.s32.totalorder %s58, %s72
      %p74 = scmp.eq.s32.totalorder %s27, 0
      %p75 = por %p73, %p74
      %s77 = sadd.s32 %s76, 1
      %p80 = scmp.eq.s32.totalorder %s21, 1
      %p81 = scmp.ne.s32.totalorder %s76, %s78
      %p82 = scmp.eq.s32.totalorder %s21, 0
      %p83 = por %p81, %p82
      %p84 = scmp.ne.s32.totalorder %s76, %s78
      %p85 = scmp.eq.s32.totalorder %s26, 1
      %p86 = por %p84, %p85
      %p87 = scmp.ne.s32.totalorder %s78, %s79
      %p88 = scmp.eq.s32.totalorder %s26, 0
      %p89 = por %p87, %p88
      %p90 = scmp.ne.s32.totalorder %s78, %s79
      %p91 = scmp.eq.s32.totalorder %s27, 1
      %p92 = por %p90, %p91
      %p94 = scmp.ne.s32.totalorder %s79, %s93
      %p95 = scmp.eq.s32.totalorder %s27, 0
      %p96 = por %p94, %p95
      %s98 = sadd.s32 %s97, 1
      %p101 = scmp.eq.s32.totalorder %s21, 1
      %p102 = scmp.ne.s32.totalorder %s97, %s99
      %p103 = scmp.eq.s32.totalorder %s21, 0
      %p104 = por %p102, %p103
      %p105 = scmp.ne.s32.totalorder %s97, %s99
      %p106 = scmp.eq.s32.totalorder %s26, 1
      %p107 = por %p105, %p106
      %p108 = scmp.ne.s32.totalorder %s99, %s100
      %p109 = scmp.eq.s32.totalorder %s26, 0
      %p110 = por %p108, %p109
      %p111 = scmp.ne.s32.totalorder %s99, %s100
      %p112 = scmp.eq.s32.totalorder %s27, 1
      %p113 = por %p111, %p112
      %p115 = scmp.ne.s32.totalorder %s100, %s114
      %p116 = scmp.eq.s32.totalorder %s27, 0
      %p117 = por %p115, %p116
      %s119 = sadd.s32 %s118, 1
      %p122 = scmp.eq.s32.totalorder %s21, 1
      %p123 = scmp.ne.s32.totalorder %s118, %s120
      %p124 = scmp.eq.s32.totalorder %s21, 0
      %p125 = por %p123, %p124
      %p126 = scmp.ne.s32.totalorder %s118, %s120
      %p127 = scmp.eq.s32.totalorder %s26, 1
      %p128 = por %p126, %p127
      %p129 = scmp.ne.s32.totalorder %s120, %s121
      %p130 = scmp.eq.s32.totalorder %s26, 0
      %p131 = por %p129, %p130
      %p132 = scmp.ne.s32.totalorder %s120, %s121
      %p133 = scmp.eq.s32.totalorder %s27, 1
      %p134 = por %p132, %p133
      %p136 = scmp.ne.s32.totalorder %s121, %s135
      %p137 = scmp.eq.s32.totalorder %s27, 0
      %p138 = por %p136, %p137
      %s140 = sadd.s32 %s139, 1
      %p143 = scmp.eq.s32.totalorder %s21, 1
      %p144 = scmp.ne.s32.totalorder %s139, %s141
      %p145 = scmp.eq.s32.totalorder %s21, 0
      %p146 = por %p144, %p145
      %p147 = scmp.ne.s32.totalorder %s139, %s141
      %p148 = scmp.eq.s32.totalorder %s26, 1
      %p149 = por %p147, %p148
      %p150 = scmp.ne.s32.totalorder %s141, %s142
      %p151 = scmp.eq.s32.totalorder %s26, 0
      %p152 = por %p150, %p151
      %p153 = scmp.ne.s32.totalorder %s141, %s142
      %p154 = scmp.eq.s32.totalorder %s27, 1
      %p155 = por %p153, %p154
      %p157 = scmp.ne.s32.totalorder %s142, %s156
      %p158 = scmp.eq.s32.totalorder %s27, 0
      %p159 = por %p157, %p158
      %s161 = sadd.s32 %s160, 1
      %p164 = scmp.eq.s32.totalorder %s21, 1
      %p165 = scmp.ne.s32.totalorder %s160, %s162
      %p166 = scmp.eq.s32.totalorder %s21, 0
      %p167 = por %p165, %p166
      %p168 = scmp.ne.s32.totalorder %s160, %s162
      %p169 = scmp.eq.s32.totalorder %s26, 1
      %p170 = por %p168, %p169
      %p171 = scmp.ne.s32.totalorder %s162, %s163
      %p172 = scmp.eq.s32.totalorder %s26, 0
      %p173 = por %p171, %p172
      %p174 = scmp.ne.s32.totalorder %s162, %s163
      %p175 = scmp.eq.s32.totalorder %s27, 1
      %p176 = por %p174, %p175
      %p178 = scmp.ne.s32.totalorder %s163, %s177
      %p179 = scmp.eq.s32.totalorder %s27, 0
      %p180 = por %p178, %p179
      %s182 = sadd.s32 %s181, 1
      %p185 = scmp.eq.s32.totalorder %s21, 1
      %p186 = scmp.ne.s32.totalorder %s181, %s183
      %p187 = scmp.eq.s32.totalorder %s21, 0
      %p188 = por %p186, %p187
      %p189 = scmp.ne.s32.totalorder %s181, %s183
      %p190 = scmp.eq.s32.totalorder %s26, 1
      %p191 = por %p189, %p190
      %p192 = scmp.ne.s32.totalorder %s183, %s184
      %p193 = scmp.eq.s32.totalorder %s26, 0
      %p194 = por %p192, %p193
      %p195 = scmp.ne.s32.totalorder %s183, %s184
      %p196 = scmp.eq.s32.totalorder %s27, 1
      %p197 = por %p195, %p196
      %p199 = scmp.ne.s32.totalorder %s184, %s198
      %p200 = scmp.eq.s32.totalorder %s27, 0
      %p201 = por %p199, %p200
      %s203 = sadd.s32 %s202, 1
      %p206 = scmp.eq.s32.totalorder %s21, 1
      %p207 = scmp.ne.s32.totalorder %s202, %s204
      %p208 = scmp.eq.s32.totalorder %s21, 0
      %p209 = por %p207, %p208
      %p210 = scmp.ne.s32.totalorder %s202, %s204
      %p211 = scmp.eq.s32.totalorder %s26, 1
      %p212 = por %p210, %p211
      %p213 = scmp.ne.s32.totalorder %s204, %s205
      %p214 = scmp.eq.s32.totalorder %s26, 0
      %p215 = por %p213, %p214
      %p216 = scmp.ne.s32.totalorder %s204, %s205
      %p217 = scmp.eq.s32.totalorder %s27, 1
      %p218 = por %p216, %p217
      %p220 = scmp.ne.s32.totalorder %s205, %s219
      %p221 = scmp.eq.s32.totalorder %s27, 0
      %p222 = por %p220, %p221
      %s223 = ssub.s32 %s21, %s28
      %p224 = scmp.eq.s32.totalorder %s223, 0
      %s226 = sadd.s32 %s225, 1
      %s227 = scalar_select %p224, %s225, %s226
      %p230 = pneg %p224
      %p231 = scmp.eq.s32.totalorder %s21, 1
      %p232 = por %p230, %p231
      %p233 = scmp.ne.s32.totalorder %s225, %s228
      %p234 = scmp.eq.s32.totalorder %s21, 0
      %p235 = por %p233, %p234
      %p236 = scmp.ne.s32.totalorder %s225, %s228
      %p237 = scmp.eq.s32.totalorder %s26, 1
      %p238 = por %p236, %p237
      %p239 = scmp.ne.s32.totalorder %s228, %s229
      %p240 = scmp.eq.s32.totalorder %s26, 0
      %p241 = por %p239, %p240
      %p242 = scmp.ne.s32.totalorder %s228, %s229
      %p243 = scmp.eq.s32.totalorder %s27, 1
      %p244 = por %p242, %p243
      %p246 = scmp.ne.s32.totalorder %s229, %s245
      %p247 = scmp.eq.s32.totalorder %s27, 0
      %p248 = por %p246, %p247
      %p249 = scmp.le.s32.totalorder 1, %s21
      %p250 = scmp.lt.s32.totalorder %s21, 3
      %p251 = pnand %p249, %p250
      %p252 = pneg %p251
      // Predicated region
      $region9: #{tpu_custom_call.1} parent=5 // pred_check
        _
      $region10: #{tpu_custom_call.1} parent=5 // pred_check_branch
        %254 = sbr.rel (%p251) target = $region12
      $region11: #{tpu_custom_call.1} parent=5 // pred_region
        %s255 = ssub.s32 %s21, 1
        // Predicated region
        $region13: #{tpu_custom_call.1} parent=11 // pred_check
          %p256 = pneg %p68
        $region14: #{tpu_custom_call.1} parent=11 // pred_check_branch
          %258 = sbr.rel (%p256) target = $region16
        $region15: #{tpu_custom_call.1} parent=11 // pred_region
          _
        $region16: #{tpu_custom_call.1} parent=11 // pred_fallthru
          _
        // Predicated region
        $region17: #{tpu_custom_call.1} parent=11 // pred_check
          %p259 = pneg %p89
        $region18: #{tpu_custom_call.1} parent=11 // pred_check_branch
          %261 = sbr.rel (%p259) target = $region20
        $region19: #{tpu_custom_call.1} parent=11 // pred_region
          _
        $region20: #{tpu_custom_call.1} parent=11 // pred_fallthru
          _
        // Predicated region
        $region21: #{tpu_custom_call.1} parent=11 // pred_check
          %p262 = pneg %p110
        $region22: #{tpu_custom_call.1} parent=11 // pred_check_branch
          %264 = sbr.rel (%p262) target = $region24
        $region23: #{tpu_custom_call.1} parent=11 // pred_region
          _
        $region24: #{tpu_custom_call.1} parent=11 // pred_fallthru
          _
        // Predicated region
        $region25: #{tpu_custom_call.1} parent=11 // pred_check
          %p265 = pneg %p131
        $region26: #{tpu_custom_call.1} parent=11 // pred_check_branch
          %267 = sbr.rel (%p265) target = $region28
        $region27: #{tpu_custom_call.1} parent=11 // pred_region
          _
        $region28: #{tpu_custom_call.1} parent=11 // pred_fallthru
          _
        // Predicated region
        $region29: #{tpu_custom_call.1} parent=11 // pred_check
          %p268 = pneg %p152
        $region30: #{tpu_custom_call.1} parent=11 // pred_check_branch
          %270 = sbr.rel (%p268) target = $region32
        $region31: #{tpu_custom_call.1} parent=11 // pred_region
          _
        $region32: #{tpu_custom_call.1} parent=11 // pred_fallthru
          _
        // Predicated region
        $region33: #{tpu_custom_call.1} parent=11 // pred_check
          %p271 = pneg %p173
        $region34: #{tpu_custom_call.1} parent=11 // pred_check_branch
          %273 = sbr.rel (%p271) target = $region36
        $region35: #{tpu_custom_call.1} parent=11 // pred_region
          _
        $region36: #{tpu_custom_call.1} parent=11 // pred_fallthru
          _
        // Predicated region
        $region37: #{tpu_custom_call.1} parent=11 // pred_check
          %p274 = pneg %p194
        $region38: #{tpu_custom_call.1} parent=11 // pred_check_branch
          %276 = sbr.rel (%p274) target = $region40
        $region39: #{tpu_custom_call.1} parent=11 // pred_region
          _
        $region40: #{tpu_custom_call.1} parent=11 // pred_fallthru
          _
        // Predicated region
        $region41: #{tpu_custom_call.1} parent=11 // pred_check
          %p277 = pneg %p215
        $region42: #{tpu_custom_call.1} parent=11 // pred_check_branch
          %279 = sbr.rel (%p277) target = $region44
        $region43: #{tpu_custom_call.1} parent=11 // pred_region
          _
        $region44: #{tpu_custom_call.1} parent=11 // pred_fallthru
          _
      $region12: #{tpu_custom_call.1} parent=5 // pred_fallthru
        _
      %p280 = scmp.lt.s32.totalorder %s21, 2
      // Predicated region
      $region45: #{tpu_custom_call.1} parent=5 // pred_check
        %p281 = pneg %p280
      $region46: #{tpu_custom_call.1} parent=5 // pred_check_branch
        %283 = sbr.rel (%p281) target = $region48
      $region47: #{tpu_custom_call.1} parent=5 // pred_region
        // Predicated region
        $region49: #{tpu_custom_call.1} parent=47 // pred_check
          %p284 = pneg %p41
        $region50: #{tpu_custom_call.1} parent=47 // pred_check_branch
          %286 = sbr.rel (%p284) target = $region52
        $region51: #{tpu_custom_call.1} parent=47 // pred_region
          %s287 = sand.u32 %s31, 1
          %s288 = scalar_lea.sflag [#allocation4], %s287
          %s289 = sand.u32 %s31, 1
          %s290 = smul.addr %s289, 32
          %s291 = scalar_lea.vmem [#allocation3], %s290
          %293 = vsyncadd %s288, 0
          %s294 = smul.addr %s21, 4
          %s295 = smul.addr %s294, 8
          %s296 = scalar_lea.hbm %s0, %s295
          %s297 = sshll.u32 %s296, 4
          %s298 = int_to_ptr.hbm [resolvable:$true] %s297
          %s299 = sshll.u32 %s291, 4
          %s300 = int_to_ptr.vmem [resolvable:$true] %s299
          %305 = dma.hbm_to_vmem [thread:$0]  %s298, 512, %s300, %s288, 256, 256, 16
        $region52: #{tpu_custom_call.1} parent=47 // pred_fallthru
          _
      $region48: #{tpu_custom_call.1} parent=5 // pred_fallthru
        _
      %p306 = scmp.le.s32.totalorder 1, %s21
      %p307 = scmp.lt.s32.totalorder %s21, 3
      %p308 = pnand %p306, %p307
      %p309 = pneg %p308
      // Predicated region
      $region53: #{tpu_custom_call.1} parent=5 // pred_check
        _
      $region54: #{tpu_custom_call.1} parent=5 // pred_check_branch
        %311 = sbr.rel (%p308) target = $region56
      $region55: #{tpu_custom_call.1} parent=5 // pred_region
        %s312 = ssub.s32 %s21, 1
        %s313 = sand.u32 %s34, 1
        %s314 = scalar_lea.sflag [#allocation4], %s313
        %s315 = sand.u32 %s34, 1
        %s316 = smul.addr %s315, 32
        %s317 = scalar_lea.vmem [#allocation3], %s316
        // Predicated region
        $region57: #{tpu_custom_call.1} parent=55 // pred_check
          %p318 = pneg %p47
        $region58: #{tpu_custom_call.1} parent=55 // pred_check_branch
          %320 = sbr.rel (%p318) target = $region60
        $region59: #{tpu_custom_call.1} parent=55 // pred_region
          %322 = dma.done %s314, 512
        $region60: #{tpu_custom_call.1} parent=55 // pred_fallthru
          _
        %s323 = sand.u32 %s34, 1
        %s324 = scalar_lea.sflag [#allocation4], %s323
        %s325 = sand.u32 %s34, 1
        %s326 = smul.addr %s325, 32
        %s327 = scalar_lea.vmem [#allocation3], %s326
        %p328 = pneg %p47
        %p329 = pneg %p44
        %p330 = pneg %p68
        %p331 = pneg %p65
        %p332 = pneg %p89
        %p333 = pneg %p86
        %p334 = pneg %p110
        %p335 = pneg %p107
        %p336 = pneg %p131
        %p337 = pneg %p128
        %p338 = pneg %p152
        %p339 = pneg %p149
        %p340 = pneg %p173
        %p341 = pneg %p170
        %p342 = pneg %p194
        %p343 = pneg %p191
        %p344 = pneg %p215
        %p345 = pneg %p212
        %p346 = pneg %p241
        %p347 = pneg %p238
        %s348 = sand.u32 %s228, 1
        %s349 = scalar_lea.sflag [#allocation5], %s348
        %s350 = sand.u32 %s228, 1
        %s351 = smul.addr %s350, 32
        %s352 = scalar_lea.vmem [#allocation6], %s351
        %v353 = vld [vmem:[%s317] sm:$0xff]
        %v354 = vld [vmem:[%s317 + $0x8] sm:$0xff]
        %v355 = vld [vmem:[%s317 + $0x10] sm:$0xff]
        %v356 = vld [vmem:[%s317 + $0x18] sm:$0xff]
        %v357 = vld [vmem:[%s1] sm:$0xff]
        %v358 = vld [vmem:[%s1 + $0x8] sm:$0xff]
        %v359 = vld [vmem:[%s2] sm:$0xff]
        %v360 = vld [vmem:[%s2 + $0x8] sm:$0xff]
        %361 = vst [vmem:[#allocation2] sm:$0xff] 0.0
        %362 = vst [vmem:[#allocation2 + $0x20] sm:$0xff] 0.0
        %363 = vst [vmem:[#allocation2 + $0x18] sm:$0xff] 0.0
        %364 = vst [vmem:[#allocation2 + $0x38] sm:$0xff] 0.0
        %365 = vst [vmem:[#allocation2 + $0x8] sm:$0xff] %v353
        %366 = vst [vmem:[#allocation2 + $0x10] sm:$0xff] %v354
        %367 = vst [vmem:[#allocation2 + $0x28] sm:$0xff] %v355
        %368 = vst [vmem:[#allocation2 + $0x30] sm:$0xff] %v356
        %v369 = vlaneseq
        %v370 = vand.u32 %v369, 127
        %v371 = vadd.s32 %v370, 128
        %vm372 = vcmp.lt.s32.totalorder %v370, 0
        %v373 = vsub.s32 0, %v370
        %v374 = vsel %vm372, %v373, %v370
        %v375 = vshrl.u32 %v374, 4
        %v376 = vand.u32 %v374, 15
        %v377 = vsub.s32 0, %v376
        %v378 = vsel %vm372, %v377, %v376
        %vm379 = vcmp.lt.s32.totalorder %v371, 0
        %v380 = vsub.s32 0, %v371
        %v381 = vsel %vm379, %v380, %v371
        %v382 = vshrl.u32 %v381, 4
        %v383 = vand.u32 %v381, 15
        %v384 = vsub.s32 0, %v383
        %v385 = vsel %vm379, %v384, %v383
        %vm386 = vcmp.ne.s32.totalorder %v378, 0
        %vm387 = vcmp.ne.s32.totalorder %v385, 0
        %vm388 = vcmp.lt.s32.totalorder %v378, 0
        %vm389 = vcmp.lt.s32.totalorder %v385, 0
        %vm390 = vmand %vm388, %vm386
        %vm391 = vmand %vm389, %vm387
        %v392 = vadd.s32 %v378, 16
        %v393 = vadd.s32 %v385, 16
        %v394 = vsel %vm390, %v392, %v378
        %v395 = vsel %vm391, %v393, %v385
        %v396 = vld [vmem:[#allocation2] sm:$0xff]
        %v397 = vld [vmem:[#allocation2 + $0x8] sm:$0xff]
        %v398 = vld [vmem:[#allocation2 + $0x10] sm:$0xff]
        %v399 = vld [vmem:[#allocation2 + $0x20] sm:$0xff]
        %v400 = vld [vmem:[#allocation2 + $0x28] sm:$0xff]
        %v401 = vld [vmem:[#allocation2 + $0x30] sm:$0xff]
        %v402 = vadd.s32 %v394, 4294967295
        %v403 = vadd.s32 %v395, 4294967295
        %vm404 = vcmp.ge.s32.totalorder %v402, 0
        %vm405 = vcmp.ge.s32.totalorder %v403, 0
        %vm406 = vcmp.lt.s32.totalorder %v402, 16
        %vm407 = vcmp.lt.s32.totalorder %v403, 16
        %vm408 = vmand %vm404, %vm406
        %vm409 = vmand %vm405, %vm407
        %v410 = vsel %vm408, 1, 0
        %v411 = vsel %vm409, 1, 0
        %vm412 = vcmp.eq.s32.totalorder %v410, 1
        %vm413 = vcmp.eq.s32.totalorder %v411, 1
        %420 = vrot.lane.b32.xlu0 %v396, 17
        %v421 = vpop.permute.xlu0 %420
        %422 = vrot.lane.b32.xlu0 %v397, 17
        %v423 = vpop.permute.xlu0 %422
        %424 = vrot.lane.b32.xlu0 %v398, 17
        %v425 = vpop.permute.xlu0 %424
        %426 = vrot.lane.b32.xlu0 %v399, 17
        %v427 = vpop.permute.xlu0 %426
        %428 = vrot.lane.b32.xlu0 %v400, 17
        %v429 = vpop.permute.xlu0 %428
        %430 = vrot.lane.b32.xlu0 %v401, 17
        %v431 = vpop.permute.xlu0 %430
        %vm432 = vcmask 138240
        %v433 = vsel %vm432, %v421, %v423
        %v434 = vsel %vm432, %v423, %v425
        %v435 = vsel %vm432, %v427, %v429
        %v436 = vsel %vm432, %v429, %v431
        %v441 = vsel %vm412, %v433, 0.0
        %v442 = vsel %vm413, %v434, 0.0
        %v443 = vsel %vm412, %v435, 0.0
        %v444 = vsel %vm413, %v436, 0.0
        %446 = vset.pattern.permute.xlu0 0
        %447 = vperm.xlu0 %446, %v357
        %v448 = vpop.permute.xlu0 %447
        %451 = vset.pattern.permute.xlu0 0
        %452 = vperm.xlu0 %451, %v358
        %v453 = vpop.permute.xlu0 %452
        %v455 = vmul.f32 %v441, %v448
        %v456 = vmul.f32 %v442, %v448
        %v457 = vmul.f32 %v443, %v453
        %v458 = vmul.f32 %v444, %v453
        %v459 = vadd.f32 %v455, 0.0
        %v460 = vadd.f32 %v456, 0.0
        %v461 = vadd.f32 %v457, 0.0
        %v462 = vadd.f32 %v458, 0.0
        %463 = vset.pattern.permute.xlu0 1
        %464 = vperm.xlu0 %463, %v357
        %v465 = vpop.permute.xlu0 %464
        %467 = vset.pattern.permute.xlu0 1
        %468 = vperm.xlu0 %467, %v358
        %v469 = vpop.permute.xlu0 %468
        %v471 = vmul.f32 %v396, %v465
        %v472 = vmul.f32 %v397, %v465
        %v473 = vmul.f32 %v398, %v465
        %v474 = vmul.f32 %v399, %v469
        %v475 = vmul.f32 %v400, %v469
        %v476 = vmul.f32 %v401, %v469
        %483 = vrot.lane.b32.xlu0 %v471, 16
        %v484 = vpop.permute.xlu0 %483
        %485 = vrot.lane.b32.xlu0 %v472, 16
        %v486 = vpop.permute.xlu0 %485
        %487 = vrot.lane.b32.xlu0 %v473, 16
        %v488 = vpop.permute.xlu0 %487
        %489 = vrot.lane.b32.xlu0 %v474, 16
        %v490 = vpop.permute.xlu0 %489
        %491 = vrot.lane.b32.xlu0 %v475, 16
        %v492 = vpop.permute.xlu0 %491
        %493 = vrot.lane.b32.xlu0 %v476, 16
        %v494 = vpop.permute.xlu0 %493
        %vm495 = vcmask 130048
        %v496 = vsel %vm495, %v484, %v486
        %v497 = vsel %vm495, %v486, %v488
        %v498 = vsel %vm495, %v490, %v492
        %v499 = vsel %vm495, %v492, %v494
        %v504 = vadd.f32 %v459, %v496
        %v505 = vadd.f32 %v460, %v497
        %v506 = vadd.f32 %v461, %v498
        %v507 = vadd.f32 %v462, %v499
        %v508 = vadd.s32 %v394, 1
        %v509 = vadd.s32 %v395, 1
        %vm510 = vcmp.ge.s32.totalorder %v508, 0
        %vm511 = vcmp.ge.s32.totalorder %v509, 0
        %vm512 = vcmp.lt.s32.totalorder %v508, 16
        %vm513 = vcmp.lt.s32.totalorder %v509, 16
        %vm514 = vmand %vm510, %vm512
        %vm515 = vmand %vm511, %vm513
        %v516 = vsel %vm514, 1, 0
        %v517 = vsel %vm515, 1, 0
        %vm518 = vcmp.eq.s32.totalorder %v516, 1
        %vm519 = vcmp.eq.s32.totalorder %v517, 1
        %520 = vrot.lane.b32.xlu0 %v396, 15
        %v521 = vpop.permute.xlu0 %520
        %522 = vrot.lane.b32.xlu0 %v397, 15
        %v523 = vpop.permute.xlu0 %522
        %524 = vrot.lane.b32.xlu0 %v398, 15
        %v525 = vpop.permute.xlu0 %524
        %526 = vrot.lane.b32.xlu0 %v399, 15
        %v527 = vpop.permute.xlu0 %526
        %528 = vrot.lane.b32.xlu0 %v400, 15
        %v529 = vpop.permute.xlu0 %528
        %530 = vrot.lane.b32.xlu0 %v401, 15
        %v531 = vpop.permute.xlu0 %530
        %vm532 = vcmask 121856
        %v533 = vsel %vm532, %v521, %v523
        %v534 = vsel %vm532, %v523, %v525
        %v535 = vsel %vm532, %v527, %v529
        %v536 = vsel %vm532, %v529, %v531
        %v541 = vsel %vm518, %v533, 0.0
        %v542 = vsel %vm519, %v534, 0.0
        %v543 = vsel %vm518, %v535, 0.0
        %v544 = vsel %vm519, %v536, 0.0
        %545 = vset.pattern.permute.xlu0 2
        %546 = vperm.xlu0 %545, %v357
        %v547 = vpop.permute.xlu0 %546
        %549 = vset.pattern.permute.xlu0 2
        %550 = vperm.xlu0 %549, %v358
        %v551 = vpop.permute.xlu0 %550
        %v553 = vmul.f32 %v541, %v547
        %v554 = vmul.f32 %v542, %v547
        %v555 = vmul.f32 %v543, %v551
        %v556 = vmul.f32 %v544, %v551
        %v557 = vadd.f32 %v504, %v553
        %v558 = vadd.f32 %v505, %v554
        %v559 = vadd.f32 %v506, %v555
        %v560 = vadd.f32 %v507, %v556
        %561 = vrot.lane.b32.xlu0 %v396, 1
        %v562 = vpop.permute.xlu0 %561
        %563 = vrot.lane.b32.xlu0 %v397, 1
        %v564 = vpop.permute.xlu0 %563
        %565 = vrot.lane.b32.xlu0 %v398, 1
        %v566 = vpop.permute.xlu0 %565
        %567 = vrot.lane.b32.xlu0 %v399, 1
        %v568 = vpop.permute.xlu0 %567
        %569 = vrot.lane.b32.xlu0 %v400, 1
        %v570 = vpop.permute.xlu0 %569
        %571 = vrot.lane.b32.xlu0 %v401, 1
        %v572 = vpop.permute.xlu0 %571
        %vm573 = vcmask 7168
        %v574 = vsel %vm573, %v562, %v564
        %v575 = vsel %vm573, %v564, %v566
        %v576 = vsel %vm573, %v568, %v570
        %v577 = vsel %vm573, %v570, %v572
        %v582 = vsel %vm412, %v574, 0.0
        %v583 = vsel %vm413, %v575, 0.0
        %v584 = vsel %vm412, %v576, 0.0
        %v585 = vsel %vm413, %v577, 0.0
        %586 = vset.pattern.permute.xlu0 3
        %587 = vperm.xlu0 %586, %v357
        %v588 = vpop.permute.xlu0 %587
        %590 = vset.pattern.permute.xlu0 3
        %591 = vperm.xlu0 %590, %v358
        %v592 = vpop.permute.xlu0 %591
        %v594 = vmul.f32 %v582, %v588
        %v595 = vmul.f32 %v583, %v588
        %v596 = vmul.f32 %v584, %v592
        %v597 = vmul.f32 %v585, %v592
        %v598 = vadd.f32 %v557, %v594
        %v599 = vadd.f32 %v558, %v595
        %v600 = vadd.f32 %v559, %v596
        %v601 = vadd.f32 %v560, %v597
        %602 = vset.pattern.permute.xlu0 4
        %603 = vperm.xlu0 %602, %v357
        %v604 = vpop.permute.xlu0 %603
        %606 = vset.pattern.permute.xlu0 4
        %607 = vperm.xlu0 %606, %v358
        %v608 = vpop.permute.xlu0 %607
        %v610 = vmul.f32 %v397, %v604
        %v611 = vmul.f32 %v398, %v604
        %v612 = vmul.f32 %v400, %v608
        %v613 = vmul.f32 %v401, %v608
        %v614 = vadd.f32 %v598, %v610
        %v615 = vadd.f32 %v599, %v611
        %v616 = vadd.f32 %v600, %v612
        %v617 = vadd.f32 %v601, %v613
        %v618 = vld [vmem:[#allocation2 + $0x8] sm:$0xff]
        %v619 = vld [vmem:[#allocation2 + $0x10] sm:$0xff]
        %v620 = vld [vmem:[#allocation2 + $0x18] sm:$0xff]
        %v621 = vld [vmem:[#allocation2 + $0x28] sm:$0xff]
        %v622 = vld [vmem:[#allocation2 + $0x30] sm:$0xff]
        %v623 = vld [vmem:[#allocation2 + $0x38] sm:$0xff]
        %630 = vrot.lane.b32.xlu0 %v618, 127
        %v631 = vpop.permute.xlu0 %630
        %632 = vrot.lane.b32.xlu0 %v619, 127
        %v633 = vpop.permute.xlu0 %632
        %634 = vrot.lane.b32.xlu0 %v620, 127
        %v635 = vpop.permute.xlu0 %634
        %636 = vrot.lane.b32.xlu0 %v621, 127
        %v637 = vpop.permute.xlu0 %636
        %638 = vrot.lane.b32.xlu0 %v622, 127
        %v639 = vpop.permute.xlu0 %638
        %640 = vrot.lane.b32.xlu0 %v623, 127
        %v641 = vpop.permute.xlu0 %640
        %vm642 = vcmask 1039360
        %v643 = vsel %vm642, %v631, %v633
        %v644 = vsel %vm642, %v633, %v635
        %v645 = vsel %vm642, %v637, %v639
        %v646 = vsel %vm642, %v639, %v641
        %v651 = vsel %vm518, %v643, 0.0
        %v652 = vsel %vm519, %v644, 0.0
        %v653 = vsel %vm518, %v645, 0.0
        %v654 = vsel %vm519, %v646, 0.0
        %655 = vset.pattern.permute.xlu0 5
        %656 = vperm.xlu0 %655, %v357
        %v657 = vpop.permute.xlu0 %656
        %659 = vset.pattern.permute.xlu0 5
        %660 = vperm.xlu0 %659, %v358
        %v661 = vpop.permute.xlu0 %660
        %v663 = vmul.f32 %v651, %v657
        %v664 = vmul.f32 %v652, %v657
        %v665 = vmul.f32 %v653, %v661
        %v666 = vmul.f32 %v654, %v661
        %v667 = vadd.f32 %v614, %v663
        %v668 = vadd.f32 %v615, %v664
        %v669 = vadd.f32 %v616, %v665
        %v670 = vadd.f32 %v617, %v666
        %671 = vrot.lane.b32.xlu0 %v618, 113
        %v672 = vpop.permute.xlu0 %671
        %673 = vrot.lane.b32.xlu0 %v619, 113
        %v674 = vpop.permute.xlu0 %673
        %675 = vrot.lane.b32.xlu0 %v620, 113
        %v676 = vpop.permute.xlu0 %675
        %677 = vrot.lane.b32.xlu0 %v621, 113
        %v678 = vpop.permute.xlu0 %677
        %679 = vrot.lane.b32.xlu0 %v622, 113
        %v680 = vpop.permute.xlu0 %679
        %681 = vrot.lane.b32.xlu0 %v623, 113
        %v682 = vpop.permute.xlu0 %681
        %vm683 = vcmask 924672
        %v684 = vsel %vm683, %v672, %v674
        %v685 = vsel %vm683, %v674, %v676
        %v686 = vsel %vm683, %v678, %v680
        %v687 = vsel %vm683, %v680, %v682
        %v692 = vsel %vm412, %v684, 0.0
        %v693 = vsel %vm413, %v685, 0.0
        %v694 = vsel %vm412, %v686, 0.0
        %v695 = vsel %vm413, %v687, 0.0
        %696 = vset.pattern.permute.xlu0 6
        %697 = vperm.xlu0 %696, %v357
        %v698 = vpop.permute.xlu0 %697
        %700 = vset.pattern.permute.xlu0 6
        %701 = vperm.xlu0 %700, %v358
        %v702 = vpop.permute.xlu0 %701
        %v704 = vmul.f32 %v692, %v698
        %v705 = vmul.f32 %v693, %v698
        %v706 = vmul.f32 %v694, %v702
        %v707 = vmul.f32 %v695, %v702
        %v708 = vadd.f32 %v667, %v704
        %v709 = vadd.f32 %v668, %v705
        %v710 = vadd.f32 %v669, %v706
        %v711 = vadd.f32 %v670, %v707
        %712 = vset.pattern.permute.xlu0 7
        %713 = vperm.xlu0 %712, %v357
        %v714 = vpop.permute.xlu0 %713
        %716 = vset.pattern.permute.xlu0 7
        %717 = vperm.xlu0 %716, %v358
        %v718 = vpop.permute.xlu0 %717
        %v720 = vmul.f32 %v618, %v714
        %v721 = vmul.f32 %v619, %v714
        %v722 = vmul.f32 %v620, %v714
        %v723 = vmul.f32 %v621, %v718
        %v724 = vmul.f32 %v622, %v718
        %v725 = vmul.f32 %v623, %v718
        %732 = vrot.lane.b32.xlu0 %v720, 112
        %v733 = vpop.permute.xlu0 %732
        %734 = vrot.lane.b32.xlu0 %v721, 112
        %v735 = vpop.permute.xlu0 %734
        %736 = vrot.lane.b32.xlu0 %v722, 112
        %v737 = vpop.permute.xlu0 %736
        %738 = vrot.lane.b32.xlu0 %v723, 112
        %v739 = vpop.permute.xlu0 %738
        %740 = vrot.lane.b32.xlu0 %v724, 112
        %v741 = vpop.permute.xlu0 %740
        %742 = vrot.lane.b32.xlu0 %v725, 112
        %v743 = vpop.permute.xlu0 %742
        %vm744 = vcmask 916480
        %v745 = vsel %vm744, %v733, %v735
        %v746 = vsel %vm744, %v735, %v737
        %v747 = vsel %vm744, %v739, %v741
        %v748 = vsel %vm744, %v741, %v743
        %v753 = vadd.f32 %v708, %v745
        %v754 = vadd.f32 %v709, %v746
        %v755 = vadd.f32 %v710, %v747
        %v756 = vadd.f32 %v711, %v748
        %757 = vrot.lane.b32.xlu0 %v618, 111
        %v758 = vpop.permute.xlu0 %757
        %759 = vrot.lane.b32.xlu0 %v619, 111
        %v760 = vpop.permute.xlu0 %759
        %761 = vrot.lane.b32.xlu0 %v620, 111
        %v762 = vpop.permute.xlu0 %761
        %763 = vrot.lane.b32.xlu0 %v621, 111
        %v764 = vpop.permute.xlu0 %763
        %765 = vrot.lane.b32.xlu0 %v622, 111
        %v766 = vpop.permute.xlu0 %765
        %767 = vrot.lane.b32.xlu0 %v623, 111
        %v768 = vpop.permute.xlu0 %767
        %vm769 = vcmask 908288
        %v770 = vsel %vm769, %v758, %v760
        %v771 = vsel %vm769, %v760, %v762
        %v772 = vsel %vm769, %v764, %v766
        %v773 = vsel %vm769, %v766, %v768
        %v778 = vsel %vm518, %v770, 0.0
        %v779 = vsel %vm519, %v771, 0.0
        %v780 = vsel %vm518, %v772, 0.0
        %v781 = vsel %vm519, %v773, 0.0
        %782 = vset.pattern.permute.xlu0 8
        %783 = vperm.xlu0 %782, %v357
        %v784 = vpop.permute.xlu0 %783
        %786 = vset.pattern.permute.xlu0 8
        %787 = vperm.xlu0 %786, %v358
        %v788 = vpop.permute.xlu0 %787
        %v790 = vmul.f32 %v778, %v784
        %v791 = vmul.f32 %v779, %v784
        %v792 = vmul.f32 %v780, %v788
        %v793 = vmul.f32 %v781, %v788
        %v794 = vadd.f32 %v753, %v790
        %v795 = vadd.f32 %v754, %v791
        %v796 = vadd.f32 %v755, %v792
        %v797 = vadd.f32 %v756, %v793
        %799 = vset.pattern.permute.xlu0 0
        %800 = vperm.xlu0 %799, %v359
        %v801 = vpop.permute.xlu0 %800
        %804 = vset.pattern.permute.xlu0 0
        %805 = vperm.xlu0 %804, %v360
        %v806 = vpop.permute.xlu0 %805
        %v808 = vadd.f32 %v794, %v801
        %v809 = vadd.f32 %v795, %v801
        %v810 = vadd.f32 %v796, %v806
        %v811 = vadd.f32 %v797, %v806
        %v812 = vld [vmem:[%s3] sm:$0xff]
        %v813 = vld [vmem:[%s3 + $0x8] sm:$0xff]
        %v814 = vld [vmem:[%s4] sm:$0xff]
        %v815 = vld [vmem:[%s4 + $0x8] sm:$0xff]
        %817 = vset.pattern.permute.xlu0 0
        %818 = vperm.xlu0 %817, %v814
        %v819 = vpop.permute.xlu0 %818
        %822 = vset.pattern.permute.xlu0 0
        %823 = vperm.xlu0 %822, %v815
        %v824 = vpop.permute.xlu0 %823
        %v827 = vsel %vm495, %v812, 0
        %v830 = vsel %vm495, %v813, 0
        %832 = vmatpush.msra.mxu0 0.0
        %833 = vmatpush.msra.mxu0 0.0
        %834 = vmatpush.msra.mxu0 0.0
        %835 = vmatpush.msra.mxu0 0.0
        %836 = vmatpush.msra.mxu0 0.0
        %837 = vmatpush.msra.mxu0 0.0
        %838 = vmatpush.msra.mxu0 0.0
        %839 = vmatpush.msra.mxu0 0.0
        %840 = vmatpush.msra.mxu0 0.0
        %841 = vmatpush.msra.mxu0 0.0
        %842 = vmatpush.msra.mxu0 0.0
        %843 = vmatpush.msra.mxu0 0.0
        %844 = vmatpush.msra.mxu0 0.0
        %845 = vmatpush.msra.mxu0 0.0
        %846 = vmatpush.msra.mxu0 %v810
        %847 = vmatpush.msra.mxu0 %v808
        %848 = vmatmul.f32.gmra.mxu0 %v827
        %v849 = vpop.f32.mrf.mxu0
        %v850 = vadd.f32 %v819, %v849
        %851 = vmatmul.f32.gmra.mxu0 %v830
        %v852 = vpop.f32.mrf.mxu0
        %v853 = vadd.f32 %v824, %v852
        %854 = vdwg.mxu0
        %855 = vmatpush.msra.mxu0 0.0
        %856 = vmatpush.msra.mxu0 0.0
        %857 = vmatpush.msra.mxu0 0.0
        %858 = vmatpush.msra.mxu0 0.0
        %859 = vmatpush.msra.mxu0 0.0
        %860 = vmatpush.msra.mxu0 0.0
        %861 = vmatpush.msra.mxu0 0.0
        %862 = vmatpush.msra.mxu0 0.0
        %863 = vmatpush.msra.mxu0 0.0
        %864 = vmatpush.msra.mxu0 0.0
        %865 = vmatpush.msra.mxu0 0.0
        %866 = vmatpush.msra.mxu0 0.0
        %867 = vmatpush.msra.mxu0 0.0
        %868 = vmatpush.msra.mxu0 0.0
        %869 = vmatpush.msra.mxu0 %v811
        %870 = vmatpush.msra.mxu0 %v809
        %871 = vmatmul.f32.gmra.mxu0 %v827
        %v872 = vpop.f32.mrf.mxu0
        %v873 = vadd.f32 %v819, %v872
        %874 = vmatmul.f32.gmra.mxu0 %v830
        %v875 = vpop.f32.mrf.mxu0
        %v876 = vadd.f32 %v824, %v875
        %877 = vdwg.mxu0
        %v878 = vld [vmem:[%s5] sm:$0xff]
        %v879 = vld [vmem:[%s5 + $0x8] sm:$0xff]
        %v880 = vld [vmem:[%s6] sm:$0xff]
        %v881 = vld [vmem:[%s6 + $0x8] sm:$0xff]
        %882 = vst [vmem:[#allocation2] sm:$0xff] 0.0
        %883 = vst [vmem:[#allocation2 + $0x20] sm:$0xff] 0.0
        %884 = vst [vmem:[#allocation2 + $0x18] sm:$0xff] 0.0
        %885 = vst [vmem:[#allocation2 + $0x38] sm:$0xff] 0.0
        %886 = vst [vmem:[#allocation2 + $0x8] sm:$0xff] %v850
        %887 = vst [vmem:[#allocation2 + $0x10] sm:$0xff] %v873
        %888 = vst [vmem:[#allocation2 + $0x28] sm:$0xff] %v853
        %889 = vst [vmem:[#allocation2 + $0x30] sm:$0xff] %v876
        %v890 = vld [vmem:[#allocation2] sm:$0xff]
        %v891 = vld [vmem:[#allocation2 + $0x8] sm:$0xff]
        %v892 = vld [vmem:[#allocation2 + $0x10] sm:$0xff]
        %v893 = vld [vmem:[#allocation2 + $0x20] sm:$0xff]
        %v894 = vld [vmem:[#allocation2 + $0x28] sm:$0xff]
        %v895 = vld [vmem:[#allocation2 + $0x30] sm:$0xff]
        %v896 = vadd.s32 %v394, 4294967294
        %v897 = vadd.s32 %v395, 4294967294
        %vm898 = vcmp.ge.s32.totalorder %v896, 0
        %vm899 = vcmp.ge.s32.totalorder %v897, 0
        %vm900 = vcmp.lt.s32.totalorder %v896, 16
        %vm901 = vcmp.lt.s32.totalorder %v897, 16
        %vm902 = vmand %vm898, %vm900
        %vm903 = vmand %vm899, %vm901
        %v904 = vsel %vm902, 1, 0
        %v905 = vsel %vm903, 1, 0
        %vm906 = vcmp.eq.s32.totalorder %v904, 1
        %vm907 = vcmp.eq.s32.totalorder %v905, 1
        %914 = vrot.lane.b32.xlu0 %v890, 34
        %v915 = vpop.permute.xlu0 %914
        %916 = vrot.lane.b32.xlu0 %v891, 34
        %v917 = vpop.permute.xlu0 %916
        %918 = vrot.lane.b32.xlu0 %v892, 34
        %v919 = vpop.permute.xlu0 %918
        %920 = vrot.lane.b32.xlu0 %v893, 34
        %v921 = vpop.permute.xlu0 %920
        %922 = vrot.lane.b32.xlu0 %v894, 34
        %v923 = vpop.permute.xlu0 %922
        %924 = vrot.lane.b32.xlu0 %v895, 34
        %v925 = vpop.permute.xlu0 %924
        %vm926 = vcmask 277504
        %v927 = vsel %vm926, %v915, %v917
        %v928 = vsel %vm926, %v917, %v919
        %v929 = vsel %vm926, %v921, %v923
        %v930 = vsel %vm926, %v923, %v925
        %v935 = vsel %vm906, %v927, 0.0
        %v936 = vsel %vm907, %v928, 0.0
        %v937 = vsel %vm906, %v929, 0.0
        %v938 = vsel %vm907, %v930, 0.0
        %940 = vset.pattern.permute.xlu0 0
        %941 = vperm.xlu0 %940, %v878
        %v942 = vpop.permute.xlu0 %941
        %945 = vset.pattern.permute.xlu0 0
        %946 = vperm.xlu0 %945, %v879
        %v947 = vpop.permute.xlu0 %946
        %v949 = vmul.f32 %v935, %v942
        %v950 = vmul.f32 %v936, %v942
        %v951 = vmul.f32 %v937, %v947
        %v952 = vmul.f32 %v938, %v947
        %v953 = vadd.f32 %v949, 0.0
        %v954 = vadd.f32 %v950, 0.0
        %v955 = vadd.f32 %v951, 0.0
        %v956 = vadd.f32 %v952, 0.0
        %957 = vrot.lane.b32.xlu0 %v890, 33
        %v958 = vpop.permute.xlu0 %957
        %959 = vrot.lane.b32.xlu0 %v891, 33
        %v960 = vpop.permute.xlu0 %959
        %961 = vrot.lane.b32.xlu0 %v892, 33
        %v962 = vpop.permute.xlu0 %961
        %963 = vrot.lane.b32.xlu0 %v893, 33
        %v964 = vpop.permute.xlu0 %963
        %965 = vrot.lane.b32.xlu0 %v894, 33
        %v966 = vpop.permute.xlu0 %965
        %967 = vrot.lane.b32.xlu0 %v895, 33
        %v968 = vpop.permute.xlu0 %967
        %vm969 = vcmask 269312
        %v970 = vsel %vm969, %v958, %v960
        %v971 = vsel %vm969, %v960, %v962
        %v972 = vsel %vm969, %v964, %v966
        %v973 = vsel %vm969, %v966, %v968
        %v978 = vsel %vm412, %v970, 0.0
        %v979 = vsel %vm413, %v971, 0.0
        %v980 = vsel %vm412, %v972, 0.0
        %v981 = vsel %vm413, %v973, 0.0
        %982 = vset.pattern.permute.xlu0 1
        %983 = vperm.xlu0 %982, %v878
        %v984 = vpop.permute.xlu0 %983
        %986 = vset.pattern.permute.xlu0 1
        %987 = vperm.xlu0 %986, %v879
        %v988 = vpop.permute.xlu0 %987
        %v990 = vmul.f32 %v978, %v984
        %v991 = vmul.f32 %v979, %v984
        %v992 = vmul.f32 %v980, %v988
        %v993 = vmul.f32 %v981, %v988
        %v994 = vadd.f32 %v953, %v990
        %v995 = vadd.f32 %v954, %v991
        %v996 = vadd.f32 %v955, %v992
        %v997 = vadd.f32 %v956, %v993
        %998 = vset.pattern.permute.xlu0 2
        %999 = vperm.xlu0 %998, %v878
        %v1000 = vpop.permute.xlu0 %999
        %1002 = vset.pattern.permute.xlu0 2
        %1003 = vperm.xlu0 %1002, %v879
        %v1004 = vpop.permute.xlu0 %1003
        %v1006 = vmul.f32 %v890, %v1000
        %v1007 = vmul.f32 %v891, %v1000
        %v1008 = vmul.f32 %v892, %v1000
        %v1009 = vmul.f32 %v893, %v1004
        %v1010 = vmul.f32 %v894, %v1004
        %v1011 = vmul.f32 %v895, %v1004
        %1018 = vrot.lane.b32.xlu0 %v1006, 32
        %v1019 = vpop.permute.xlu0 %1018
        %1020 = vrot.lane.b32.xlu0 %v1007, 32
        %v1021 = vpop.permute.xlu0 %1020
        %1022 = vrot.lane.b32.xlu0 %v1008, 32
        %v1023 = vpop.permute.xlu0 %1022
        %1024 = vrot.lane.b32.xlu0 %v1009, 32
        %v1025 = vpop.permute.xlu0 %1024
        %1026 = vrot.lane.b32.xlu0 %v1010, 32
        %v1027 = vpop.permute.xlu0 %1026
        %1028 = vrot.lane.b32.xlu0 %v1011, 32
        %v1029 = vpop.permute.xlu0 %1028
        %vm1030 = vcmask 261120
        %v1031 = vsel %vm1030, %v1019, %v1021
        %v1032 = vsel %vm1030, %v1021, %v1023
        %v1033 = vsel %vm1030, %v1025, %v1027
        %v1034 = vsel %vm1030, %v1027, %v1029
        %v1039 = vadd.f32 %v994, %v1031
        %v1040 = vadd.f32 %v995, %v1032
        %v1041 = vadd.f32 %v996, %v1033
        %v1042 = vadd.f32 %v997, %v1034
        %1043 = vrot.lane.b32.xlu0 %v890, 31
        %v1044 = vpop.permute.xlu0 %1043
        %1045 = vrot.lane.b32.xlu0 %v891, 31
        %v1046 = vpop.permute.xlu0 %1045
        %1047 = vrot.lane.b32.xlu0 %v892, 31
        %v1048 = vpop.permute.xlu0 %1047
        %1049 = vrot.lane.b32.xlu0 %v893, 31
        %v1050 = vpop.permute.xlu0 %1049
        %1051 = vrot.lane.b32.xlu0 %v894, 31
        %v1052 = vpop.permute.xlu0 %1051
        %1053 = vrot.lane.b32.xlu0 %v895, 31
        %v1054 = vpop.permute.xlu0 %1053
        %vm1055 = vcmask 252928
        %v1056 = vsel %vm1055, %v1044, %v1046
        %v1057 = vsel %vm1055, %v1046, %v1048
        %v1058 = vsel %vm1055, %v1050, %v1052
        %v1059 = vsel %vm1055, %v1052, %v1054
        %v1064 = vsel %vm518, %v1056, 0.0
        %v1065 = vsel %vm519, %v1057, 0.0
        %v1066 = vsel %vm518, %v1058, 0.0
        %v1067 = vsel %vm519, %v1059, 0.0
        %1068 = vset.pattern.permute.xlu0 3
        %1069 = vperm.xlu0 %1068, %v878
        %v1070 = vpop.permute.xlu0 %1069
        %1072 = vset.pattern.permute.xlu0 3
        %1073 = vperm.xlu0 %1072, %v879
        %v1074 = vpop.permute.xlu0 %1073
        %v1076 = vmul.f32 %v1064, %v1070
        %v1077 = vmul.f32 %v1065, %v1070
        %v1078 = vmul.f32 %v1066, %v1074
        %v1079 = vmul.f32 %v1067, %v1074
        %v1080 = vadd.f32 %v1039, %v1076
        %v1081 = vadd.f32 %v1040, %v1077
        %v1082 = vadd.f32 %v1041, %v1078
        %v1083 = vadd.f32 %v1042, %v1079
        %v1084 = vadd.s32 %v394, 2
        %v1085 = vadd.s32 %v395, 2
        %vm1086 = vcmp.ge.s32.totalorder %v1084, 0
        %vm1087 = vcmp.ge.s32.totalorder %v1085, 0
        %vm1088 = vcmp.lt.s32.totalorder %v1084, 16
        %vm1089 = vcmp.lt.s32.totalorder %v1085, 16
        %vm1090 = vmand %vm1086, %vm1088
        %vm1091 = vmand %vm1087, %vm1089
        %v1092 = vsel %vm1090, 1, 0
        %v1093 = vsel %vm1091, 1, 0
        %vm1094 = vcmp.eq.s32.totalorder %v1092, 1
        %vm1095 = vcmp.eq.s32.totalorder %v1093, 1
        %1096 = vrot.lane.b32.xlu0 %v890, 30
        %v1097 = vpop.permute.xlu0 %1096
        %1098 = vrot.lane.b32.xlu0 %v891, 30
        %v1099 = vpop.permute.xlu0 %1098
        %1100 = vrot.lane.b32.xlu0 %v892, 30
        %v1101 = vpop.permute.xlu0 %1100
        %1102 = vrot.lane.b32.xlu0 %v893, 30
        %v1103 = vpop.permute.xlu0 %1102
        %1104 = vrot.lane.b32.xlu0 %v894, 30
        %v1105 = vpop.permute.xlu0 %1104
        %1106 = vrot.lane.b32.xlu0 %v895, 30
        %v1107 = vpop.permute.xlu0 %1106
        %vm1108 = vcmask 244736
        %v1109 = vsel %vm1108, %v1097, %v1099
        %v1110 = vsel %vm1108, %v1099, %v1101
        %v1111 = vsel %vm1108, %v1103, %v1105
        %v1112 = vsel %vm1108, %v1105, %v1107
        %v1117 = vsel %vm1094, %v1109, 0.0
        %v1118 = vsel %vm1095, %v1110, 0.0
        %v1119 = vsel %vm1094, %v1111, 0.0
        %v1120 = vsel %vm1095, %v1112, 0.0
        %1121 = vset.pattern.permute.xlu0 4
        %1122 = vperm.xlu0 %1121, %v878
        %v1123 = vpop.permute.xlu0 %1122
        %1125 = vset.pattern.permute.xlu0 4
        %1126 = vperm.xlu0 %1125, %v879
        %v1127 = vpop.permute.xlu0 %1126
        %v1129 = vmul.f32 %v1117, %v1123
        %v1130 = vmul.f32 %v1118, %v1123
        %v1131 = vmul.f32 %v1119, %v1127
        %v1132 = vmul.f32 %v1120, %v1127
        %v1133 = vadd.f32 %v1080, %v1129
        %v1134 = vadd.f32 %v1081, %v1130
        %v1135 = vadd.f32 %v1082, %v1131
        %v1136 = vadd.f32 %v1083, %v1132
        %1137 = vrot.lane.b32.xlu0 %v890, 18
        %v1138 = vpop.permute.xlu0 %1137
        %1139 = vrot.lane.b32.xlu0 %v891, 18
        %v1140 = vpop.permute.xlu0 %1139
        %1141 = vrot.lane.b32.xlu0 %v892, 18
        %v1142 = vpop.permute.xlu0 %1141
        %1143 = vrot.lane.b32.xlu0 %v893, 18
        %v1144 = vpop.permute.xlu0 %1143
        %1145 = vrot.lane.b32.xlu0 %v894, 18
        %v1146 = vpop.permute.xlu0 %1145
        %1147 = vrot.lane.b32.xlu0 %v895, 18
        %v1148 = vpop.permute.xlu0 %1147
        %vm1149 = vcmask 146432
        %v1150 = vsel %vm1149, %v1138, %v1140
        %v1151 = vsel %vm1149, %v1140, %v1142
        %v1152 = vsel %vm1149, %v1144, %v1146
        %v1153 = vsel %vm1149, %v1146, %v1148
        %v1158 = vsel %vm906, %v1150, 0.0
        %v1159 = vsel %vm907, %v1151, 0.0
        %v1160 = vsel %vm906, %v1152, 0.0
        %v1161 = vsel %vm907, %v1153, 0.0
        %1162 = vset.pattern.permute.xlu0 5
        %1163 = vperm.xlu0 %1162, %v878
        %v1164 = vpop.permute.xlu0 %1163
        %1166 = vset.pattern.permute.xlu0 5
        %1167 = vperm.xlu0 %1166, %v879
        %v1168 = vpop.permute.xlu0 %1167
        %v1170 = vmul.f32 %v1158, %v1164
        %v1171 = vmul.f32 %v1159, %v1164
        %v1172 = vmul.f32 %v1160, %v1168
        %v1173 = vmul.f32 %v1161, %v1168
        %v1174 = vadd.f32 %v1133, %v1170
        %v1175 = vadd.f32 %v1134, %v1171
        %v1176 = vadd.f32 %v1135, %v1172
        %v1177 = vadd.f32 %v1136, %v1173
        %1178 = vrot.lane.b32.xlu0 %v890, 17
        %v1179 = vpop.permute.xlu0 %1178
        %1180 = vrot.lane.b32.xlu0 %v891, 17
        %v1181 = vpop.permute.xlu0 %1180
        %1182 = vrot.lane.b32.xlu0 %v892, 17
        %v1183 = vpop.permute.xlu0 %1182
        %1184 = vrot.lane.b32.xlu0 %v893, 17
        %v1185 = vpop.permute.xlu0 %1184
        %1186 = vrot.lane.b32.xlu0 %v894, 17
        %v1187 = vpop.permute.xlu0 %1186
        %1188 = vrot.lane.b32.xlu0 %v895, 17
        %v1189 = vpop.permute.xlu0 %1188
        %v1190 = vsel %vm432, %v1179, %v1181
        %v1191 = vsel %vm432, %v1181, %v1183
        %v1192 = vsel %vm432, %v1185, %v1187
        %v1193 = vsel %vm432, %v1187, %v1189
        %v1198 = vsel %vm412, %v1190, 0.0
        %v1199 = vsel %vm413, %v1191, 0.0
        %v1200 = vsel %vm412, %v1192, 0.0
        %v1201 = vsel %vm413, %v1193, 0.0
        %1202 = vset.pattern.permute.xlu0 6
        %1203 = vperm.xlu0 %1202, %v878
        %v1204 = vpop.permute.xlu0 %1203
        %1206 = vset.pattern.permute.xlu0 6
        %1207 = vperm.xlu0 %1206, %v879
        %v1208 = vpop.permute.xlu0 %1207
        %v1210 = vmul.f32 %v1198, %v1204
        %v1211 = vmul.f32 %v1199, %v1204
        %v1212 = vmul.f32 %v1200, %v1208
        %v1213 = vmul.f32 %v1201, %v1208
        %v1214 = vadd.f32 %v1174, %v1210
        %v1215 = vadd.f32 %v1175, %v1211
        %v1216 = vadd.f32 %v1176, %v1212
        %v1217 = vadd.f32 %v1177, %v1213
        %1218 = vset.pattern.permute.xlu0 7
        %1219 = vperm.xlu0 %1218, %v878
        %v1220 = vpop.permute.xlu0 %1219
        %1222 = vset.pattern.permute.xlu0 7
        %1223 = vperm.xlu0 %1222, %v879
        %v1224 = vpop.permute.xlu0 %1223
        %v1226 = vmul.f32 %v890, %v1220
        %v1227 = vmul.f32 %v891, %v1220
        %v1228 = vmul.f32 %v892, %v1220
        %v1229 = vmul.f32 %v893, %v1224
        %v1230 = vmul.f32 %v894, %v1224
        %v1231 = vmul.f32 %v895, %v1224
        %1238 = vrot.lane.b32.xlu0 %v1226, 16
        %v1239 = vpop.permute.xlu0 %1238
        %1240 = vrot.lane.b32.xlu0 %v1227, 16
        %v1241 = vpop.permute.xlu0 %1240
        %1242 = vrot.lane.b32.xlu0 %v1228, 16
        %v1243 = vpop.permute.xlu0 %1242
        %1244 = vrot.lane.b32.xlu0 %v1229, 16
        %v1245 = vpop.permute.xlu0 %1244
        %1246 = vrot.lane.b32.xlu0 %v1230, 16
        %v1247 = vpop.permute.xlu0 %1246
        %1248 = vrot.lane.b32.xlu0 %v1231, 16
        %v1249 = vpop.permute.xlu0 %1248
        %v1250 = vsel %vm495, %v1239, %v1241
        %v1251 = vsel %vm495, %v1241, %v1243
        %v1252 = vsel %vm495, %v1245, %v1247
        %v1253 = vsel %vm495, %v1247, %v1249
        %v1258 = vadd.f32 %v1214, %v1250
        %v1259 = vadd.f32 %v1215, %v1251
        %v1260 = vadd.f32 %v1216, %v1252
        %v1261 = vadd.f32 %v1217, %v1253
        %1262 = vrot.lane.b32.xlu0 %v890, 15
        %v1263 = vpop.permute.xlu0 %1262
        %1264 = vrot.lane.b32.xlu0 %v891, 15
        %v1265 = vpop.permute.xlu0 %1264
        %1266 = vrot.lane.b32.xlu0 %v892, 15
        %v1267 = vpop.permute.xlu0 %1266
        %1268 = vrot.lane.b32.xlu0 %v893, 15
        %v1269 = vpop.permute.xlu0 %1268
        %1270 = vrot.lane.b32.xlu0 %v894, 15
        %v1271 = vpop.permute.xlu0 %1270
        %1272 = vrot.lane.b32.xlu0 %v895, 15
        %v1273 = vpop.permute.xlu0 %1272
        %v1274 = vsel %vm532, %v1263, %v1265
        %v1275 = vsel %vm532, %v1265, %v1267
        %v1276 = vsel %vm532, %v1269, %v1271
        %v1277 = vsel %vm532, %v1271, %v1273
        %v1282 = vsel %vm518, %v1274, 0.0
        %v1283 = vsel %vm519, %v1275, 0.0
        %v1284 = vsel %vm518, %v1276, 0.0
        %v1285 = vsel %vm519, %v1277, 0.0
        %1286 = vset.pattern.permute.xlu0 8
        %1287 = vperm.xlu0 %1286, %v878
        %v1288 = vpop.permute.xlu0 %1287
        %1290 = vset.pattern.permute.xlu0 8
        %1291 = vperm.xlu0 %1290, %v879
        %v1292 = vpop.permute.xlu0 %1291
        %v1294 = vmul.f32 %v1282, %v1288
        %v1295 = vmul.f32 %v1283, %v1288
        %v1296 = vmul.f32 %v1284, %v1292
        %v1297 = vmul.f32 %v1285, %v1292
        %v1298 = vadd.f32 %v1258, %v1294
        %v1299 = vadd.f32 %v1259, %v1295
        %v1300 = vadd.f32 %v1260, %v1296
        %v1301 = vadd.f32 %v1261, %v1297
        %1302 = vrot.lane.b32.xlu0 %v890, 14
        %v1303 = vpop.permute.xlu0 %1302
        %1304 = vrot.lane.b32.xlu0 %v891, 14
        %v1305 = vpop.permute.xlu0 %1304
        %1306 = vrot.lane.b32.xlu0 %v892, 14
        %v1307 = vpop.permute.xlu0 %1306
        %1308 = vrot.lane.b32.xlu0 %v893, 14
        %v1309 = vpop.permute.xlu0 %1308
        %1310 = vrot.lane.b32.xlu0 %v894, 14
        %v1311 = vpop.permute.xlu0 %1310
        %1312 = vrot.lane.b32.xlu0 %v895, 14
        %v1313 = vpop.permute.xlu0 %1312
        %vm1314 = vcmask 113664
        %v1315 = vsel %vm1314, %v1303, %v1305
        %v1316 = vsel %vm1314, %v1305, %v1307
        %v1317 = vsel %vm1314, %v1309, %v1311
        %v1318 = vsel %vm1314, %v1311, %v1313
        %v1323 = vsel %vm1094, %v1315, 0.0
        %v1324 = vsel %vm1095, %v1316, 0.0
        %v1325 = vsel %vm1094, %v1317, 0.0
        %v1326 = vsel %vm1095, %v1318, 0.0
        %1327 = vset.pattern.permute.xlu0 9
        %1328 = vperm.xlu0 %1327, %v878
        %v1329 = vpop.permute.xlu0 %1328
        %1331 = vset.pattern.permute.xlu0 9
        %1332 = vperm.xlu0 %1331, %v879
        %v1333 = vpop.permute.xlu0 %1332
        %v1335 = vmul.f32 %v1323, %v1329
        %v1336 = vmul.f32 %v1324, %v1329
        %v1337 = vmul.f32 %v1325, %v1333
        %v1338 = vmul.f32 %v1326, %v1333
        %v1339 = vadd.f32 %v1298, %v1335
        %v1340 = vadd.f32 %v1299, %v1336
        %v1341 = vadd.f32 %v1300, %v1337
        %v1342 = vadd.f32 %v1301, %v1338
        %1343 = vrot.lane.b32.xlu0 %v890, 2
        %v1344 = vpop.permute.xlu0 %1343
        %1345 = vrot.lane.b32.xlu0 %v891, 2
        %v1346 = vpop.permute.xlu0 %1345
        %1347 = vrot.lane.b32.xlu0 %v892, 2
        %v1348 = vpop.permute.xlu0 %1347
        %1349 = vrot.lane.b32.xlu0 %v893, 2
        %v1350 = vpop.permute.xlu0 %1349
        %1351 = vrot.lane.b32.xlu0 %v894, 2
        %v1352 = vpop.permute.xlu0 %1351
        %1353 = vrot.lane.b32.xlu0 %v895, 2
        %v1354 = vpop.permute.xlu0 %1353
        %vm1355 = vcmask 15360
        %v1356 = vsel %vm1355, %v1344, %v1346
        %v1357 = vsel %vm1355, %v1346, %v1348
        %v1358 = vsel %vm1355, %v1350, %v1352
        %v1359 = vsel %vm1355, %v1352, %v1354
        %v1364 = vsel %vm906, %v1356, 0.0
        %v1365 = vsel %vm907, %v1357, 0.0
        %v1366 = vsel %vm906, %v1358, 0.0
        %v1367 = vsel %vm907, %v1359, 0.0
        %1368 = vset.pattern.permute.xlu0 10
        %1369 = vperm.xlu0 %1368, %v878
        %v1370 = vpop.permute.xlu0 %1369
        %1372 = vset.pattern.permute.xlu0 10
        %1373 = vperm.xlu0 %1372, %v879
        %v1374 = vpop.permute.xlu0 %1373
        %v1376 = vmul.f32 %v1364, %v1370
        %v1377 = vmul.f32 %v1365, %v1370
        %v1378 = vmul.f32 %v1366, %v1374
        %v1379 = vmul.f32 %v1367, %v1374
        %v1380 = vadd.f32 %v1339, %v1376
        %v1381 = vadd.f32 %v1340, %v1377
        %v1382 = vadd.f32 %v1341, %v1378
        %v1383 = vadd.f32 %v1342, %v1379
        %1384 = vrot.lane.b32.xlu0 %v890, 1
        %v1385 = vpop.permute.xlu0 %1384
        %1386 = vrot.lane.b32.xlu0 %v891, 1
        %v1387 = vpop.permute.xlu0 %1386
        %1388 = vrot.lane.b32.xlu0 %v892, 1
        %v1389 = vpop.permute.xlu0 %1388
        %1390 = vrot.lane.b32.xlu0 %v893, 1
        %v1391 = vpop.permute.xlu0 %1390
        %1392 = vrot.lane.b32.xlu0 %v894, 1
        %v1393 = vpop.permute.xlu0 %1392
        %1394 = vrot.lane.b32.xlu0 %v895, 1
        %v1395 = vpop.permute.xlu0 %1394
        %v1396 = vsel %vm573, %v1385, %v1387
        %v1397 = vsel %vm573, %v1387, %v1389
        %v1398 = vsel %vm573, %v1391, %v1393
        %v1399 = vsel %vm573, %v1393, %v1395
        %v1404 = vsel %vm412, %v1396, 0.0
        %v1405 = vsel %vm413, %v1397, 0.0
        %v1406 = vsel %vm412, %v1398, 0.0
        %v1407 = vsel %vm413, %v1399, 0.0
        %1408 = vset.pattern.permute.xlu0 11
        %1409 = vperm.xlu0 %1408, %v878
        %v1410 = vpop.permute.xlu0 %1409
        %1412 = vset.pattern.permute.xlu0 11
        %1413 = vperm.xlu0 %1412, %v879
        %v1414 = vpop.permute.xlu0 %1413
        %v1416 = vmul.f32 %v1404, %v1410
        %v1417 = vmul.f32 %v1405, %v1410
        %v1418 = vmul.f32 %v1406, %v1414
        %v1419 = vmul.f32 %v1407, %v1414
        %v1420 = vadd.f32 %v1380, %v1416
        %v1421 = vadd.f32 %v1381, %v1417
        %v1422 = vadd.f32 %v1382, %v1418
        %v1423 = vadd.f32 %v1383, %v1419
        %1424 = vset.pattern.permute.xlu0 12
        %1425 = vperm.xlu0 %1424, %v878
        %v1426 = vpop.permute.xlu0 %1425
        %1428 = vset.pattern.permute.xlu0 12
        %1429 = vperm.xlu0 %1428, %v879
        %v1430 = vpop.permute.xlu0 %1429
        %v1432 = vmul.f32 %v891, %v1426
        %v1433 = vmul.f32 %v892, %v1426
        %v1434 = vmul.f32 %v894, %v1430
        %v1435 = vmul.f32 %v895, %v1430
        %v1436 = vadd.f32 %v1420, %v1432
        %v1437 = vadd.f32 %v1421, %v1433
        %v1438 = vadd.f32 %v1422, %v1434
        %v1439 = vadd.f32 %v1423, %v1435
        %v1440 = vld [vmem:[#allocation2 + $0x8] sm:$0xff]
        %v1441 = vld [vmem:[#allocation2 + $0x10] sm:$0xff]
        %v1442 = vld [vmem:[#allocation2 + $0x18] sm:$0xff]
        %v1443 = vld [vmem:[#allocation2 + $0x28] sm:$0xff]
        %v1444 = vld [vmem:[#allocation2 + $0x30] sm:$0xff]
        %v1445 = vld [vmem:[#allocation2 + $0x38] sm:$0xff]
        %1452 = vrot.lane.b32.xlu0 %v1440, 127
        %v1453 = vpop.permute.xlu0 %1452
        %1454 = vrot.lane.b32.xlu0 %v1441, 127
        %v1455 = vpop.permute.xlu0 %1454
        %1456 = vrot.lane.b32.xlu0 %v1442, 127
        %v1457 = vpop.permute.xlu0 %1456
        %1458 = vrot.lane.b32.xlu0 %v1443, 127
        %v1459 = vpop.permute.xlu0 %1458
        %1460 = vrot.lane.b32.xlu0 %v1444, 127
        %v1461 = vpop.permute.xlu0 %1460
        %1462 = vrot.lane.b32.xlu0 %v1445, 127
        %v1463 = vpop.permute.xlu0 %1462
        %v1464 = vsel %vm642, %v1453, %v1455
        %v1465 = vsel %vm642, %v1455, %v1457
        %v1466 = vsel %vm642, %v1459, %v1461
        %v1467 = vsel %vm642, %v1461, %v1463
        %v1472 = vsel %vm518, %v1464, 0.0
        %v1473 = vsel %vm519, %v1465, 0.0
        %v1474 = vsel %vm518, %v1466, 0.0
        %v1475 = vsel %vm519, %v1467, 0.0
        %1476 = vset.pattern.permute.xlu0 13
        %1477 = vperm.xlu0 %1476, %v878
        %v1478 = vpop.permute.xlu0 %1477
        %1480 = vset.pattern.permute.xlu0 13
        %1481 = vperm.xlu0 %1480, %v879
        %v1482 = vpop.permute.xlu0 %1481
        %v1484 = vmul.f32 %v1472, %v1478
        %v1485 = vmul.f32 %v1473, %v1478
        %v1486 = vmul.f32 %v1474, %v1482
        %v1487 = vmul.f32 %v1475, %v1482
        %v1488 = vadd.f32 %v1436, %v1484
        %v1489 = vadd.f32 %v1437, %v1485
        %v1490 = vadd.f32 %v1438, %v1486
        %v1491 = vadd.f32 %v1439, %v1487
        %1492 = vrot.lane.b32.xlu0 %v1440, 126
        %v1493 = vpop.permute.xlu0 %1492
        %1494 = vrot.lane.b32.xlu0 %v1441, 126
        %v1495 = vpop.permute.xlu0 %1494
        %1496 = vrot.lane.b32.xlu0 %v1442, 126
        %v1497 = vpop.permute.xlu0 %1496
        %1498 = vrot.lane.b32.xlu0 %v1443, 126
        %v1499 = vpop.permute.xlu0 %1498
        %1500 = vrot.lane.b32.xlu0 %v1444, 126
        %v1501 = vpop.permute.xlu0 %1500
        %1502 = vrot.lane.b32.xlu0 %v1445, 126
        %v1503 = vpop.permute.xlu0 %1502
        %vm1504 = vcmask 1031168
        %v1505 = vsel %vm1504, %v1493, %v1495
        %v1506 = vsel %vm1504, %v1495, %v1497
        %v1507 = vsel %vm1504, %v1499, %v1501
        %v1508 = vsel %vm1504, %v1501, %v1503
        %v1513 = vsel %vm1094, %v1505, 0.0
        %v1514 = vsel %vm1095, %v1506, 0.0
        %v1515 = vsel %vm1094, %v1507, 0.0
        %v1516 = vsel %vm1095, %v1508, 0.0
        %1517 = vset.pattern.permute.xlu0 14
        %1518 = vperm.xlu0 %1517, %v878
        %v1519 = vpop.permute.xlu0 %1518
        %1521 = vset.pattern.permute.xlu0 14
        %1522 = vperm.xlu0 %1521, %v879
        %v1523 = vpop.permute.xlu0 %1522
        %v1525 = vmul.f32 %v1513, %v1519
        %v1526 = vmul.f32 %v1514, %v1519
        %v1527 = vmul.f32 %v1515, %v1523
        %v1528 = vmul.f32 %v1516, %v1523
        %v1529 = vadd.f32 %v1488, %v1525
        %v1530 = vadd.f32 %v1489, %v1526
        %v1531 = vadd.f32 %v1490, %v1527
        %v1532 = vadd.f32 %v1491, %v1528
        %1533 = vrot.lane.b32.xlu0 %v1440, 114
        %v1534 = vpop.permute.xlu0 %1533
        %1535 = vrot.lane.b32.xlu0 %v1441, 114
        %v1536 = vpop.permute.xlu0 %1535
        %1537 = vrot.lane.b32.xlu0 %v1442, 114
        %v1538 = vpop.permute.xlu0 %1537
        %1539 = vrot.lane.b32.xlu0 %v1443, 114
        %v1540 = vpop.permute.xlu0 %1539
        %1541 = vrot.lane.b32.xlu0 %v1444, 114
        %v1542 = vpop.permute.xlu0 %1541
        %1543 = vrot.lane.b32.xlu0 %v1445, 114
        %v1544 = vpop.permute.xlu0 %1543
        %vm1545 = vcmask 932864
        %v1546 = vsel %vm1545, %v1534, %v1536
        %v1547 = vsel %vm1545, %v1536, %v1538
        %v1548 = vsel %vm1545, %v1540, %v1542
        %v1549 = vsel %vm1545, %v1542, %v1544
        %v1554 = vsel %vm906, %v1546, 0.0
        %v1555 = vsel %vm907, %v1547, 0.0
        %v1556 = vsel %vm906, %v1548, 0.0
        %v1557 = vsel %vm907, %v1549, 0.0
        %1558 = vset.pattern.permute.xlu0 15
        %1559 = vperm.xlu0 %1558, %v878
        %v1560 = vpop.permute.xlu0 %1559
        %1562 = vset.pattern.permute.xlu0 15
        %1563 = vperm.xlu0 %1562, %v879
        %v1564 = vpop.permute.xlu0 %1563
        %v1566 = vmul.f32 %v1554, %v1560
        %v1567 = vmul.f32 %v1555, %v1560
        %v1568 = vmul.f32 %v1556, %v1564
        %v1569 = vmul.f32 %v1557, %v1564
        %v1570 = vadd.f32 %v1529, %v1566
        %v1571 = vadd.f32 %v1530, %v1567
        %v1572 = vadd.f32 %v1531, %v1568
        %v1573 = vadd.f32 %v1532, %v1569
        %1574 = vrot.lane.b32.xlu0 %v1440, 113
        %v1575 = vpop.permute.xlu0 %1574
        %1576 = vrot.lane.b32.xlu0 %v1441, 113
        %v1577 = vpop.permute.xlu0 %1576
        %1578 = vrot.lane.b32.xlu0 %v1442, 113
        %v1579 = vpop.permute.xlu0 %1578
        %1580 = vrot.lane.b32.xlu0 %v1443, 113
        %v1581 = vpop.permute.xlu0 %1580
        %1582 = vrot.lane.b32.xlu0 %v1444, 113
        %v1583 = vpop.permute.xlu0 %1582
        %1584 = vrot.lane.b32.xlu0 %v1445, 113
        %v1585 = vpop.permute.xlu0 %1584
        %v1586 = vsel %vm683, %v1575, %v1577
        %v1587 = vsel %vm683, %v1577, %v1579
        %v1588 = vsel %vm683, %v1581, %v1583
        %v1589 = vsel %vm683, %v1583, %v1585
        %v1594 = vsel %vm412, %v1586, 0.0
        %v1595 = vsel %vm413, %v1587, 0.0
        %v1596 = vsel %vm412, %v1588, 0.0
        %v1597 = vsel %vm413, %v1589, 0.0
        %1598 = vset.pattern.permute.xlu0 16
        %1599 = vperm.xlu0 %1598, %v878
        %v1600 = vpop.permute.xlu0 %1599
        %1602 = vset.pattern.permute.xlu0 16
        %1603 = vperm.xlu0 %1602, %v879
        %v1604 = vpop.permute.xlu0 %1603
        %v1606 = vmul.f32 %v1594, %v1600
        %v1607 = vmul.f32 %v1595, %v1600
        %v1608 = vmul.f32 %v1596, %v1604
        %v1609 = vmul.f32 %v1597, %v1604
        %v1610 = vadd.f32 %v1570, %v1606
        %v1611 = vadd.f32 %v1571, %v1607
        %v1612 = vadd.f32 %v1572, %v1608
        %v1613 = vadd.f32 %v1573, %v1609
        %1614 = vset.pattern.permute.xlu0 17
        %1615 = vperm.xlu0 %1614, %v878
        %v1616 = vpop.permute.xlu0 %1615
        %1618 = vset.pattern.permute.xlu0 17
        %1619 = vperm.xlu0 %1618, %v879
        %v1620 = vpop.permute.xlu0 %1619
        %v1622 = vmul.f32 %v1440, %v1616
        %v1623 = vmul.f32 %v1441, %v1616
        %v1624 = vmul.f32 %v1442, %v1616
        %v1625 = vmul.f32 %v1443, %v1620
        %v1626 = vmul.f32 %v1444, %v1620
        %v1627 = vmul.f32 %v1445, %v1620
        %1634 = vrot.lane.b32.xlu0 %v1622, 112
        %v1635 = vpop.permute.xlu0 %1634
        %1636 = vrot.lane.b32.xlu0 %v1623, 112
        %v1637 = vpop.permute.xlu0 %1636
        %1638 = vrot.lane.b32.xlu0 %v1624, 112
        %v1639 = vpop.permute.xlu0 %1638
        %1640 = vrot.lane.b32.xlu0 %v1625, 112
        %v1641 = vpop.permute.xlu0 %1640
        %1642 = vrot.lane.b32.xlu0 %v1626, 112
        %v1643 = vpop.permute.xlu0 %1642
        %1644 = vrot.lane.b32.xlu0 %v1627, 112
        %v1645 = vpop.permute.xlu0 %1644
        %v1646 = vsel %vm744, %v1635, %v1637
        %v1647 = vsel %vm744, %v1637, %v1639
        %v1648 = vsel %vm744, %v1641, %v1643
        %v1649 = vsel %vm744, %v1643, %v1645
        %v1654 = vadd.f32 %v1610, %v1646
        %v1655 = vadd.f32 %v1611, %v1647
        %v1656 = vadd.f32 %v1612, %v1648
        %v1657 = vadd.f32 %v1613, %v1649
        %1658 = vrot.lane.b32.xlu0 %v1440, 111
        %v1659 = vpop.permute.xlu0 %1658
        %1660 = vrot.lane.b32.xlu0 %v1441, 111
        %v1661 = vpop.permute.xlu0 %1660
        %1662 = vrot.lane.b32.xlu0 %v1442, 111
        %v1663 = vpop.permute.xlu0 %1662
        %1664 = vrot.lane.b32.xlu0 %v1443, 111
        %v1665 = vpop.permute.xlu0 %1664
        %1666 = vrot.lane.b32.xlu0 %v1444, 111
        %v1667 = vpop.permute.xlu0 %1666
        %1668 = vrot.lane.b32.xlu0 %v1445, 111
        %v1669 = vpop.permute.xlu0 %1668
        %v1670 = vsel %vm769, %v1659, %v1661
        %v1671 = vsel %vm769, %v1661, %v1663
        %v1672 = vsel %vm769, %v1665, %v1667
        %v1673 = vsel %vm769, %v1667, %v1669
        %v1678 = vsel %vm518, %v1670, 0.0
        %v1679 = vsel %vm519, %v1671, 0.0
        %v1680 = vsel %vm518, %v1672, 0.0
        %v1681 = vsel %vm519, %v1673, 0.0
        %1682 = vset.pattern.permute.xlu0 18
        %1683 = vperm.xlu0 %1682, %v878
        %v1684 = vpop.permute.xlu0 %1683
        %1686 = vset.pattern.permute.xlu0 18
        %1687 = vperm.xlu0 %1686, %v879
        %v1688 = vpop.permute.xlu0 %1687
        %v1690 = vmul.f32 %v1678, %v1684
        %v1691 = vmul.f32 %v1679, %v1684
        %v1692 = vmul.f32 %v1680, %v1688
        %v1693 = vmul.f32 %v1681, %v1688
        %v1694 = vadd.f32 %v1654, %v1690
        %v1695 = vadd.f32 %v1655, %v1691
        %v1696 = vadd.f32 %v1656, %v1692
        %v1697 = vadd.f32 %v1657, %v1693
        %1698 = vrot.lane.b32.xlu0 %v1440, 110
        %v1699 = vpop.permute.xlu0 %1698
        %1700 = vrot.lane.b32.xlu0 %v1441, 110
        %v1701 = vpop.permute.xlu0 %1700
        %1702 = vrot.lane.b32.xlu0 %v1442, 110
        %v1703 = vpop.permute.xlu0 %1702
        %1704 = vrot.lane.b32.xlu0 %v1443, 110
        %v1705 = vpop.permute.xlu0 %1704
        %1706 = vrot.lane.b32.xlu0 %v1444, 110
        %v1707 = vpop.permute.xlu0 %1706
        %1708 = vrot.lane.b32.xlu0 %v1445, 110
        %v1709 = vpop.permute.xlu0 %1708
        %vm1710 = vcmask 900096
        %v1711 = vsel %vm1710, %v1699, %v1701
        %v1712 = vsel %vm1710, %v1701, %v1703
        %v1713 = vsel %vm1710, %v1705, %v1707
        %v1714 = vsel %vm1710, %v1707, %v1709
        %v1719 = vsel %vm1094, %v1711, 0.0
        %v1720 = vsel %vm1095, %v1712, 0.0
        %v1721 = vsel %vm1094, %v1713, 0.0
        %v1722 = vsel %vm1095, %v1714, 0.0
        %1723 = vset.pattern.permute.xlu0 19
        %1724 = vperm.xlu0 %1723, %v878
        %v1725 = vpop.permute.xlu0 %1724
        %1727 = vset.pattern.permute.xlu0 19
        %1728 = vperm.xlu0 %1727, %v879
        %v1729 = vpop.permute.xlu0 %1728
        %v1731 = vmul.f32 %v1719, %v1725
        %v1732 = vmul.f32 %v1720, %v1725
        %v1733 = vmul.f32 %v1721, %v1729
        %v1734 = vmul.f32 %v1722, %v1729
        %v1735 = vadd.f32 %v1694, %v1731
        %v1736 = vadd.f32 %v1695, %v1732
        %v1737 = vadd.f32 %v1696, %v1733
        %v1738 = vadd.f32 %v1697, %v1734
        %1739 = vrot.lane.b32.xlu0 %v1440, 98
        %v1740 = vpop.permute.xlu0 %1739
        %1741 = vrot.lane.b32.xlu0 %v1441, 98
        %v1742 = vpop.permute.xlu0 %1741
        %1743 = vrot.lane.b32.xlu0 %v1442, 98
        %v1744 = vpop.permute.xlu0 %1743
        %1745 = vrot.lane.b32.xlu0 %v1443, 98
        %v1746 = vpop.permute.xlu0 %1745
        %1747 = vrot.lane.b32.xlu0 %v1444, 98
        %v1748 = vpop.permute.xlu0 %1747
        %1749 = vrot.lane.b32.xlu0 %v1445, 98
        %v1750 = vpop.permute.xlu0 %1749
        %vm1751 = vcmask 801792
        %v1752 = vsel %vm1751, %v1740, %v1742
        %v1753 = vsel %vm1751, %v1742, %v1744
        %v1754 = vsel %vm1751, %v1746, %v1748
        %v1755 = vsel %vm1751, %v1748, %v1750
        %v1760 = vsel %vm906, %v1752, 0.0
        %v1761 = vsel %vm907, %v1753, 0.0
        %v1762 = vsel %vm906, %v1754, 0.0
        %v1763 = vsel %vm907, %v1755, 0.0
        %1764 = vset.pattern.permute.xlu0 20
        %1765 = vperm.xlu0 %1764, %v878
        %v1766 = vpop.permute.xlu0 %1765
        %1768 = vset.pattern.permute.xlu0 20
        %1769 = vperm.xlu0 %1768, %v879
        %v1770 = vpop.permute.xlu0 %1769
        %v1772 = vmul.f32 %v1760, %v1766
        %v1773 = vmul.f32 %v1761, %v1766
        %v1774 = vmul.f32 %v1762, %v1770
        %v1775 = vmul.f32 %v1763, %v1770
        %v1776 = vadd.f32 %v1735, %v1772
        %v1777 = vadd.f32 %v1736, %v1773
        %v1778 = vadd.f32 %v1737, %v1774
        %v1779 = vadd.f32 %v1738, %v1775
        %1780 = vrot.lane.b32.xlu0 %v1440, 97
        %v1781 = vpop.permute.xlu0 %1780
        %1782 = vrot.lane.b32.xlu0 %v1441, 97
        %v1783 = vpop.permute.xlu0 %1782
        %1784 = vrot.lane.b32.xlu0 %v1442, 97
        %v1785 = vpop.permute.xlu0 %1784
        %1786 = vrot.lane.b32.xlu0 %v1443, 97
        %v1787 = vpop.permute.xlu0 %1786
        %1788 = vrot.lane.b32.xlu0 %v1444, 97
        %v1789 = vpop.permute.xlu0 %1788
        %1790 = vrot.lane.b32.xlu0 %v1445, 97
        %v1791 = vpop.permute.xlu0 %1790
        %vm1792 = vcmask 793600
        %v1793 = vsel %vm1792, %v1781, %v1783
        %v1794 = vsel %vm1792, %v1783, %v1785
        %v1795 = vsel %vm1792, %v1787, %v1789
        %v1796 = vsel %vm1792, %v1789, %v1791
        %v1801 = vsel %vm412, %v1793, 0.0
        %v1802 = vsel %vm413, %v1794, 0.0
        %v1803 = vsel %vm412, %v1795, 0.0
        %v1804 = vsel %vm413, %v1796, 0.0
        %1805 = vset.pattern.permute.xlu0 21
        %1806 = vperm.xlu0 %1805, %v878
        %v1807 = vpop.permute.xlu0 %1806
        %1809 = vset.pattern.permute.xlu0 21
        %1810 = vperm.xlu0 %1809, %v879
        %v1811 = vpop.permute.xlu0 %1810
        %v1813 = vmul.f32 %v1801, %v1807
        %v1814 = vmul.f32 %v1802, %v1807
        %v1815 = vmul.f32 %v1803, %v1811
        %v1816 = vmul.f32 %v1804, %v1811
        %v1817 = vadd.f32 %v1776, %v1813
        %v1818 = vadd.f32 %v1777, %v1814
        %v1819 = vadd.f32 %v1778, %v1815
        %v1820 = vadd.f32 %v1779, %v1816
        %1821 = vset.pattern.permute.xlu0 22
        %1822 = vperm.xlu0 %1821, %v878
        %v1823 = vpop.permute.xlu0 %1822
        %1825 = vset.pattern.permute.xlu0 22
        %1826 = vperm.xlu0 %1825, %v879
        %v1827 = vpop.permute.xlu0 %1826
        %v1829 = vmul.f32 %v1440, %v1823
        %v1830 = vmul.f32 %v1441, %v1823
        %v1831 = vmul.f32 %v1442, %v1823
        %v1832 = vmul.f32 %v1443, %v1827
        %v1833 = vmul.f32 %v1444, %v1827
        %v1834 = vmul.f32 %v1445, %v1827
        %1841 = vrot.lane.b32.xlu0 %v1829, 96
        %v1842 = vpop.permute.xlu0 %1841
        %1843 = vrot.lane.b32.xlu0 %v1830, 96
        %v1844 = vpop.permute.xlu0 %1843
        %1845 = vrot.lane.b32.xlu0 %v1831, 96
        %v1846 = vpop.permute.xlu0 %1845
        %1847 = vrot.lane.b32.xlu0 %v1832, 96
        %v1848 = vpop.permute.xlu0 %1847
        %1849 = vrot.lane.b32.xlu0 %v1833, 96
        %v1850 = vpop.permute.xlu0 %1849
        %1851 = vrot.lane.b32.xlu0 %v1834, 96
        %v1852 = vpop.permute.xlu0 %1851
        %vm1853 = vcmask 785408
        %v1854 = vsel %vm1853, %v1842, %v1844
        %v1855 = vsel %vm1853, %v1844, %v1846
        %v1856 = vsel %vm1853, %v1848, %v1850
        %v1857 = vsel %vm1853, %v1850, %v1852
        %v1862 = vadd.f32 %v1817, %v1854
        %v1863 = vadd.f32 %v1818, %v1855
        %v1864 = vadd.f32 %v1819, %v1856
        %v1865 = vadd.f32 %v1820, %v1857
        %1866 = vrot.lane.b32.xlu0 %v1440, 95
        %v1867 = vpop.permute.xlu0 %1866
        %1868 = vrot.lane.b32.xlu0 %v1441, 95
        %v1869 = vpop.permute.xlu0 %1868
        %1870 = vrot.lane.b32.xlu0 %v1442, 95
        %v1871 = vpop.permute.xlu0 %1870
        %1872 = vrot.lane.b32.xlu0 %v1443, 95
        %v1873 = vpop.permute.xlu0 %1872
        %1874 = vrot.lane.b32.xlu0 %v1444, 95
        %v1875 = vpop.permute.xlu0 %1874
        %1876 = vrot.lane.b32.xlu0 %v1445, 95
        %v1877 = vpop.permute.xlu0 %1876
        %vm1878 = vcmask 777216
        %v1879 = vsel %vm1878, %v1867, %v1869
        %v1880 = vsel %vm1878, %v1869, %v1871
        %v1881 = vsel %vm1878, %v1873, %v1875
        %v1882 = vsel %vm1878, %v1875, %v1877
        %v1887 = vsel %vm518, %v1879, 0.0
        %v1888 = vsel %vm519, %v1880, 0.0
        %v1889 = vsel %vm518, %v1881, 0.0
        %v1890 = vsel %vm519, %v1882, 0.0
        %1891 = vset.pattern.permute.xlu0 23
        %1892 = vperm.xlu0 %1891, %v878
        %v1893 = vpop.permute.xlu0 %1892
        %1895 = vset.pattern.permute.xlu0 23
        %1896 = vperm.xlu0 %1895, %v879
        %v1897 = vpop.permute.xlu0 %1896
        %v1899 = vmul.f32 %v1887, %v1893
        %v1900 = vmul.f32 %v1888, %v1893
        %v1901 = vmul.f32 %v1889, %v1897
        %v1902 = vmul.f32 %v1890, %v1897
        %v1903 = vadd.f32 %v1862, %v1899
        %v1904 = vadd.f32 %v1863, %v1900
        %v1905 = vadd.f32 %v1864, %v1901
        %v1906 = vadd.f32 %v1865, %v1902
        %1907 = vrot.lane.b32.xlu0 %v1440, 94
        %v1908 = vpop.permute.xlu0 %1907
        %1909 = vrot.lane.b32.xlu0 %v1441, 94
        %v1910 = vpop.permute.xlu0 %1909
        %1911 = vrot.lane.b32.xlu0 %v1442, 94
        %v1912 = vpop.permute.xlu0 %1911
        %1913 = vrot.lane.b32.xlu0 %v1443, 94
        %v1914 = vpop.permute.xlu0 %1913
        %1915 = vrot.lane.b32.xlu0 %v1444, 94
        %v1916 = vpop.permute.xlu0 %1915
        %1917 = vrot.lane.b32.xlu0 %v1445, 94
        %v1918 = vpop.permute.xlu0 %1917
        %vm1919 = vcmask 769024
        %v1920 = vsel %vm1919, %v1908, %v1910
        %v1921 = vsel %vm1919, %v1910, %v1912
        %v1922 = vsel %vm1919, %v1914, %v1916
        %v1923 = vsel %vm1919, %v1916, %v1918
        %v1928 = vsel %vm1094, %v1920, 0.0
        %v1929 = vsel %vm1095, %v1921, 0.0
        %v1930 = vsel %vm1094, %v1922, 0.0
        %v1931 = vsel %vm1095, %v1923, 0.0
        %1932 = vset.pattern.permute.xlu0 24
        %1933 = vperm.xlu0 %1932, %v878
        %v1934 = vpop.permute.xlu0 %1933
        %1936 = vset.pattern.permute.xlu0 24
        %1937 = vperm.xlu0 %1936, %v879
        %v1938 = vpop.permute.xlu0 %1937
        %v1940 = vmul.f32 %v1928, %v1934
        %v1941 = vmul.f32 %v1929, %v1934
        %v1942 = vmul.f32 %v1930, %v1938
        %v1943 = vmul.f32 %v1931, %v1938
        %v1944 = vadd.f32 %v1903, %v1940
        %v1945 = vadd.f32 %v1904, %v1941
        %v1946 = vadd.f32 %v1905, %v1942
        %v1947 = vadd.f32 %v1906, %v1943
        %1949 = vset.pattern.permute.xlu0 0
        %1950 = vperm.xlu0 %1949, %v880
        %v1951 = vpop.permute.xlu0 %1950
        %1954 = vset.pattern.permute.xlu0 0
        %1955 = vperm.xlu0 %1954, %v881
        %v1956 = vpop.permute.xlu0 %1955
        %v1958 = vadd.f32 %v1944, %v1951
        %v1959 = vadd.f32 %v1945, %v1951
        %v1960 = vadd.f32 %v1946, %v1956
        %v1961 = vadd.f32 %v1947, %v1956
        %v1962 = vld [vmem:[%s7] sm:$0xff]
        %v1963 = vld [vmem:[%s7 + $0x8] sm:$0xff]
        %v1964 = vld [vmem:[%s8] sm:$0xff]
        %v1965 = vld [vmem:[%s8 + $0x8] sm:$0xff]
        %1967 = vset.pattern.permute.xlu0 0
        %1968 = vperm.xlu0 %1967, %v1964
        %v1969 = vpop.permute.xlu0 %1968
        %1972 = vset.pattern.permute.xlu0 0
        %1973 = vperm.xlu0 %1972, %v1965
        %v1974 = vpop.permute.xlu0 %1973
        %v1977 = vsel %vm495, %v1962, 0
        %v1980 = vsel %vm495, %v1963, 0
        %1982 = vmatpush.msra.mxu0 0.0
        %1983 = vmatpush.msra.mxu0 0.0
        %1984 = vmatpush.msra.mxu0 0.0
        %1985 = vmatpush.msra.mxu0 0.0
        %1986 = vmatpush.msra.mxu0 0.0
        %1987 = vmatpush.msra.mxu0 0.0
        %1988 = vmatpush.msra.mxu0 0.0
        %1989 = vmatpush.msra.mxu0 0.0
        %1990 = vmatpush.msra.mxu0 0.0
        %1991 = vmatpush.msra.mxu0 0.0
        %1992 = vmatpush.msra.mxu0 0.0
        %1993 = vmatpush.msra.mxu0 0.0
        %1994 = vmatpush.msra.mxu0 0.0
        %1995 = vmatpush.msra.mxu0 0.0
        %1996 = vmatpush.msra.mxu0 %v1960
        %1997 = vmatpush.msra.mxu0 %v1958
        %1998 = vmatmul.f32.gmra.mxu0 %v1977
        %v1999 = vpop.f32.mrf.mxu0
        %v2000 = vadd.f32 %v1969, %v1999
        %2001 = vmatmul.f32.gmra.mxu0 %v1980
        %v2002 = vpop.f32.mrf.mxu0
        %v2003 = vadd.f32 %v1974, %v2002
        %2004 = vdwg.mxu0
        %2005 = vmatpush.msra.mxu0 0.0
        %2006 = vmatpush.msra.mxu0 0.0
        %2007 = vmatpush.msra.mxu0 0.0
        %2008 = vmatpush.msra.mxu0 0.0
        %2009 = vmatpush.msra.mxu0 0.0
        %2010 = vmatpush.msra.mxu0 0.0
        %2011 = vmatpush.msra.mxu0 0.0
        %2012 = vmatpush.msra.mxu0 0.0
        %2013 = vmatpush.msra.mxu0 0.0
        %2014 = vmatpush.msra.mxu0 0.0
        %2015 = vmatpush.msra.mxu0 0.0
        %2016 = vmatpush.msra.mxu0 0.0
        %2017 = vmatpush.msra.mxu0 0.0
        %2018 = vmatpush.msra.mxu0 0.0
        %2019 = vmatpush.msra.mxu0 %v1961
        %2020 = vmatpush.msra.mxu0 %v1959
        %2021 = vmatmul.f32.gmra.mxu0 %v1977
        %v2022 = vpop.f32.mrf.mxu0
        %v2023 = vadd.f32 %v1969, %v2022
        %2024 = vmatmul.f32.gmra.mxu0 %v1980
        %v2025 = vpop.f32.mrf.mxu0
        %v2026 = vadd.f32 %v1974, %v2025
        %2027 = vdwg.mxu0
        %2028 = vst [vmem:[%s352] sm:$0xff] %v2000
        %2029 = vst [vmem:[%s352 + $0x8] sm:$0xff] %v2023
        %2030 = vst [vmem:[%s352 + $0x10] sm:$0xff] %v2003
        %2031 = vst [vmem:[%s352 + $0x18] sm:$0xff] %v2026
        %s2032 = sand.u32 %s228, 1
        %s2033 = scalar_lea.sflag [#allocation5], %s2032
        %s2034 = sand.u32 %s228, 1
        %s2035 = smul.addr %s2034, 32
        %s2036 = scalar_lea.vmem [#allocation6], %s2035
        // Predicated region
        $region61: #{tpu_custom_call.1} parent=55 // pred_check
          %p2037 = pneg %p238
        $region62: #{tpu_custom_call.1} parent=55 // pred_check_branch
          %2039 = sbr.rel (%p2037) target = $region64
        $region63: #{tpu_custom_call.1} parent=55 // pred_region
          %2041 = vsyncadd %s2033, 0
          %s2042 = smul.addr %s26, 4
          %s2043 = smul.addr %s2042, 8
          %s2044 = scalar_lea.hbm %s9, %s2043
          %s2045 = sshll.u32 %s2036, 4
          %s2046 = int_to_ptr.vmem [resolvable:$true] %s2045
          %s2047 = sshll.u32 %s2044, 4
          %s2048 = int_to_ptr.hbm [resolvable:$true] %s2047
          %2053 = dma.vmem_to_hbm [thread:$0]  %s2046, 512, %s2048, %s2033, 256, 256, 16
        $region64: #{tpu_custom_call.1} parent=55 // pred_fallthru
          _
      $region56: #{tpu_custom_call.1} parent=5 // pred_fallthru
        _
      %p2054 = scmp.le.s32.totalorder 2, %s21
      // Predicated region
      $region65: #{tpu_custom_call.1} parent=5 // pred_check
        %p2055 = pneg %p2054
      $region66: #{tpu_custom_call.1} parent=5 // pred_check_branch
        %2057 = sbr.rel (%p2055) target = $region68
      $region67: #{tpu_custom_call.1} parent=5 // pred_region
        %s2058 = ssub.s32 %s21, 2
        // Predicated region
        $region69: #{tpu_custom_call.1} parent=67 // pred_check
          %p2059 = pneg %p244
        $region70: #{tpu_custom_call.1} parent=67 // pred_check_branch
          %2061 = sbr.rel (%p2059) target = $region72
        $region71: #{tpu_custom_call.1} parent=67 // pred_region
          %s2062 = sand.u32 %s229, 1
          %s2063 = scalar_lea.sflag [#allocation5], %s2062
          %s2064 = sand.u32 %s229, 1
          %s2065 = smul.addr %s2064, 32
          %s2066 = scalar_lea.vmem [#allocation6], %s2065
          %2068 = dma.done %s2063, 512
        $region72: #{tpu_custom_call.1} parent=67 // pred_fallthru
          _
      $region68: #{tpu_custom_call.1} parent=5 // pred_fallthru
        _
    $region6: #{tpu_custom_call.1} parent=1 // loop_footer
      %s25 = sadd.s32 1, %s21
    $region7: #{tpu_custom_call.1} parent=1 // loop_footer_branch
      %20 = sbr.rel target = $region3
    $region8: #{tpu_custom_call.1} parent=1 // loop_exit
      _
    %2069 = vsyncpa [#allocation4], 1
    %s2070 = scalar_lea.sflag [#allocation4], 1
    %2071 = vsyncpa %s2070, 1
    %2072 = vsyncpa [#allocation5], 1
    %s2073 = scalar_lea.sflag [#allocation5], 1
    %2074 = vsyncpa %s2073, 1

</llo_original>
